<compile_context>
chip_gen: v7x
topology: tpu7x:2x2x1
jax: 0.10.0
libtpu: 0.0.40
codegen_flags: <defaults>
</compile_context>

<pallas_src>
import functools

import numpy as np
import jax
import jax.numpy as jnp
from jax.experimental import pallas as pl
from jax.experimental.pallas import tpu as pltpu


def _time_aware_cost_kernel(xi_ref, xj_ref, zi_ref, zj_ref, out_ref, d_ref, *, w1, w2, w3):
    xi = xi_ref[...]          # (DF, N, BB)  f32, pair axis in lanes
    xj = xj_ref[...]          # (DF, M, BB)
    zi = zi_ref[...]          # (T, DZ, BB)
    zj = zj_ref[...]          # (T, DZ, BB)

    df, n, bb = xi.shape
    m = xj.shape[1]
    t = zi.shape[0]

    # ---- same-sample check (torch: all(x_i == x_j) and all(z_i == z_j)) ---------------
    if xi.shape == xj.shape:
        mism_x = jnp.max(jnp.max(jnp.where(xi != xj, 1.0, 0.0), axis=0),
                         axis=0, keepdims=True)                              # (1, BB)
    else:
        mism_x = jnp.ones((1, bb), jnp.float32)
    mism_z = jnp.max(jnp.max(jnp.where(zi != zj, 1.0, 0.0), axis=0),
                     axis=0, keepdims=True)                                  # (1, BB)
    mismatch = jnp.maximum(mism_x, mism_z)                                   # (1, BB)

    # ---- soft_dtw(x_i, x_j): row normalization + pairwise L2 + max normalization ------
    xs = [xi[f] for f in range(df)]            # df x (N, BB) full vregs
    ys = [xj[f] for f in range(df)]            # df x (M, BB)

    sx = xs[0] * xs[0]
    sy = ys[0] * ys[0]
    for f in range(1, df):                     # unrolled d=4 contraction (VPU FMAs)
        sx = sx + xs[f] * xs[f]
        sy = sy + ys[f] * ys[f]
    inv_nx = pl.reciprocal(jnp.sqrt(sx) + 1e-8, approx=True)                 # (N, BB) EUP
    inv_ny = pl.reciprocal(jnp.sqrt(sy) + 1e-8, approx=True)                 # (M, BB)
    xn = [xs[f] * inv_nx for f in range(df)]
    yn = [ys[f] * inv_ny for f in range(df)]

    # Per-row-of-x distance tiles: dist_rows[i][j, b] = || xn[i, :, b] - yn[j, :, b] ||_2
    dist_rows = []
    for i in range(n):
        acc2 = None
        for f in range(df):
            dif = xn[f][i:i + 1, :] - yn[f]                                  # (M, BB)
            acc2 = dif * dif if acc2 is None else acc2 + dif * dif
        dist_rows.append(jnp.sqrt(acc2))                                     # (M, BB)

    row_max = dist_rows[0]
    for r in dist_rows[1:]:
        row_max = jnp.maximum(row_max, r)
    dmax = jnp.max(row_max, axis=0, keepdims=True)                           # (1, BB)
    inv_dmax = pl.reciprocal(dmax + 1e-8, approx=True)                       # (1, BB) EUP

    # Stage normalized distances as (n*m, BB) rows in VMEM: each DP cell is a row load.
    for i in range(n):
        d_ref[i * m:(i + 1) * m, :] = dist_rows[i] * inv_dmax

    def dcell(i, j):
        k = i * m + j
        return d_ref[k:k + 1, :]                                             # (1, BB)

    # DTW dynamic program, fully unrolled (n, m static).  Identical recurrence to the
    # torch +inf-boundary version: first row / column are exact cumulative sums,
    # interior cells take min(up, left, diag).
    acc = dcell(0, 0)
    r_prev = [acc]
    for j in range(1, m):
        acc = acc + dcell(0, j)
        r_prev.append(acc)
    for i in range(1, n):
        r_curr = [r_prev[0] + dcell(i, 0)]
        for j in range(1, m):
            best = jnp.minimum(jnp.minimum(r_prev[j], r_curr[j - 1]), r_prev[j - 1])
            r_curr.append(dcell(i, j) + best)
        r_prev = r_curr
    d_time = jnp.abs(r_prev[m - 1])                                          # (1, BB)

    # ---- latent Frobenius distance -----------------------------------------------------
    zd = zi - zj                                                             # (T, DZ, BB)
    d_latent = jnp.sqrt(jnp.sum(jnp.sum(zd * zd, axis=0), axis=0, keepdims=True)) * (1.0 / t)

    # ---- autocorrelation (ACF, lags 1..5) L1 distance ----------------------------------
    # NOTE: assumes t >= 6 so every lag has a non-empty overlap (as in the module's use).
    def acf_rows(z):
        zc = z - jnp.mean(z, axis=0, keepdims=True)                          # (T, DZ, BB)
        return [jnp.sum(zc[: t - lag] * zc[lag:], axis=0) for lag in range(1, 6)]  # 5 x (DZ, BB)

    ri = acf_rows(zi)
    rj = acf_rows(zj)
    den_i = jnp.abs(ri[0])
    den_j = jnp.abs(rj[0])
    for a, b in zip(ri[1:], rj[1:]):
        den_i = jnp.maximum(den_i, jnp.abs(a))
        den_j = jnp.maximum(den_j, jnp.abs(b))
    inv_i = pl.reciprocal(den_i, approx=True)      # no epsilon: faithful to torch
    inv_j = pl.reciprocal(den_j, approx=True)
    diff_acc = None
    for a, b in zip(ri, rj):
        term = jnp.abs(a * inv_i - b * inv_j)                                # (DZ, BB)
        diff_acc = term if diff_acc is None else diff_acc + term
    d_acf = jnp.sum(diff_acc, axis=0, keepdims=True)                         # (1, BB)

    total = w1 * d_time + w2 * d_latent + w3 * d_acf                         # (1, BB)
    out_ref[...] = jnp.where(mismatch > 0.0, total, 0.0).astype(out_ref.dtype)


def time_aware_cost_batched(x_i, x_j, z_i, z_j, w1=0.4, w2=0.4, w3=0.2, block_b=128):
    """Batched TimeAwareCost: one scalar cost per (x_i[b], x_j[b], z_i[b], z_j[b]) pair."""
    x_i = jnp.asarray(x_i, jnp.float32)
    x_j = jnp.asarray(x_j, jnp.float32)
    z_i = jnp.asarray(z_i, jnp.float32)
    z_j = jnp.asarray(z_j, jnp.float32)
    B, N, DF = x_i.shape
    _, M, DFj = x_j.shape
    _, T, DZ = z_i.shape
    assert DF == DFj and x_j.shape[0] == B and z_j.shape == (B, T, DZ)

    BB = block_b                         # 128 lanes per step: one vreg per DP value
    G = pl.cdiv(B, BB)
    B_pad = G * BB

    def prep_x(a):                       # (B, rows, DF) -> (DF, rows, B_pad)
        if B_pad != B:
            a = jnp.pad(a, ((0, B_pad - B), (0, 0), (0, 0)))
        return jnp.transpose(a, (2, 1, 0))

    def prep_z(a):                       # (B, T, DZ) -> (T, DZ, B_pad)
        if B_pad != B:
            a = jnp.pad(a, ((0, B_pad - B), (0, 0), (0, 0)))
        return jnp.transpose(a, (1, 2, 0))

    kernel = functools.partial(_time_aware_cost_kernel, w1=w1, w2=w2, w3=w3)
    out = pl.pallas_call(
        kernel,
        out_shape=jax.ShapeDtypeStruct((1, B_pad), jnp.float32),
        grid=(G,),
        in_specs=[
            pl.BlockSpec((DF, N, BB), lambda g: (0, 0, g)),
            pl.BlockSpec((DF, M, BB), lambda g: (0, 0, g)),
            pl.BlockSpec((T, DZ, BB), lambda g: (0, 0, g)),
            pl.BlockSpec((T, DZ, BB), lambda g: (0, 0, g)),
        ],
        out_specs=pl.BlockSpec((1, BB), lambda g: (0, g)),
        scratch_shapes=[pltpu.VMEM((N * M, BB), jnp.float32)],
        compiler_params=pltpu.CompilerParams(dimension_semantics=("parallel",)),
    )(prep_x(x_i), prep_x(x_j), prep_z(z_i), prep_z(z_j))
    return out[0, :B]


def time_aware_cost(x_i, x_j, z_i, z_j, w1=0.4, w2=0.4, w3=0.2):
    """Single-pair TimeAwareCost.forward (returns a scalar f32)."""
    out = time_aware_cost_batched(x_i[None], x_j[None], z_i[None], z_j[None], w1, w2, w3)
    return out[0]


# ---------------- pure numpy reference (mirrors the torch module) -------------------
def _reference(x_i, x_j, z_i, z_j, w=(0.4, 0.4, 0.2)):
    x_i, x_j = np.asarray(x_i, np.float64), np.asarray(x_j, np.float64)
    z_i, z_j = np.asarray(z_i, np.float64), np.asarray(z_j, np.float64)
    if np.array_equal(x_i, x_j) and np.array_equal(z_i, z_j):
        return 0.0

    def soft_dtw(x, y):
        n, m = x.shape[0], y.shape[0]
        xn = x / (np.linalg.norm(x, axis=1, keepdims=True) + 1e-8)
        yn = y / (np.linalg.norm(y, axis=1, keepdims=True) + 1e-8)
        D = np.sqrt(((xn[:, None, :] - yn[None, :, :]) ** 2).sum(-1))
        D = D / (D.max() + 1e-8)
        R = np.full((n + 1, m + 1), np.inf)
        R[0, 0] = 0.0
        for i in range(1, n + 1):
            for j in range(1, m + 1):
                R[i, j] = D[i - 1, j - 1] + min(R[i - 1, j], R[i, j - 1], R[i - 1, j - 1])
        return abs(R[-1, -1])

    def autocorr(z):
        zc = z - z.mean(0)
        acf = np.stack([(zc[:-lag] * zc[lag:]).sum(0) for lag in range(1, 6)])
        return acf / np.abs(acf).max(0)

    d_time = soft_dtw(x_i, x_j)
    d_latent = np.linalg.norm(z_i - z_j) / z_i.shape[0]
    d_acf = np.abs(autocorr(z_i) - autocorr(z_j)).sum()
    return w[0] * d_time + w[1] * d_latent + w[2] * d_acf


if __name__ == "__main__":
    # deterministic params (module defaults): w1=0.4, w2=0.4, w3=0.2
    key = jax.random.PRNGKey(0)
    k1, k2, k3, k4 = jax.random.split(key, 4)

    B, N, D_FEAT, T, D_Z = 4, 8, 4, 8, 32     # batch of pairs; per-pair shapes as before
    x_i = jax.random.normal(k1, (B, N, D_FEAT), jnp.float32)
    x_j = jax.random.normal(k2, (B, N, D_FEAT), jnp.float32)
    z_i = jax.random.normal(k3, (B, T, D_Z), jnp.float32)
    z_j = jax.random.normal(k4, (B, T, D_Z), jnp.float32)

    # make pair 2 a "same sample" pair -> must yield exactly 0
    x_j = x_j.at[2].set(x_i[2])
    z_j = z_j.at[2].set(z_i[2])

    out = jax.block_until_ready(time_aware_cost_batched(x_i, x_j, z_i, z_j))
    ref = np.array([_reference(x_i[b], x_j[b], z_i[b], z_j[b]) for b in range(B)])
    assert np.allclose(np.asarray(out), ref, rtol=2e-2, atol=2e-2), (np.asarray(out), ref)
    assert float(out[2]) == 0.0

    # multi-block grid (G = 2): exercises batch blocking + lane-dense output across steps
    B2 = 160
    kk = jax.random.split(jax.random.PRNGKey(1), 4)
    X_i = jax.random.normal(kk[0], (B2, N, D_FEAT), jnp.float32)
    X_j = jax.random.normal(kk[1], (B2, N, D_FEAT), jnp.float32)
    Z_i = jax.random.normal(kk[2], (B2, T, D_Z), jnp.float32)
    Z_j = jax.random.normal(kk[3], (B2, T, D_Z), jnp.float32)
    out2 = jax.block_until_ready(time_aware_cost_batched(X_i, X_j, Z_i, Z_j))
    idx = list(range(0, B2, 11))
    ref2 = np.array([_reference(X_i[b], X_j[b], Z_i[b], Z_j[b]) for b in idx])
    assert np.allclose(np.asarray(out2)[idx], ref2, rtol=2e-2, atol=2e-2)

    # single-pair wrapper (the literal forward() of the module)
    out0 = jax.block_until_ready(time_aware_cost(x_i[0], x_j[0], z_i[0], z_j[0]))
    assert np.allclose(float(out0), ref[0], rtol=2e-2, atol=2e-2), (float(out0), ref[0])

    print("KERNEL_OK")
</pallas_src>

<mosaic_0001>
module attributes {stable_mosaic.version = 11 : i64} {
  func.func @_time_aware_cost_kernel(%arg0: i32, %arg1: memref<4x8x128xf32, #tpu.memory_space<vmem>>, %arg2: memref<4x8x128xf32, #tpu.memory_space<vmem>>, %arg3: memref<8x32x128xf32, #tpu.memory_space<vmem>>, %arg4: memref<8x32x128xf32, #tpu.memory_space<vmem>>, %arg5: memref<1x128xf32, #tpu.memory_space<vmem>>, %arg6: memref<64x128xf32, #tpu.memory_space<vmem>>) attributes {dimension_semantics = [#tpu.dimension_semantics<parallel>], iteration_bounds = array<i64: 1>, scalar_prefetch = 0 : i64, scratch_operands = 1 : i64, tpu.core_type = #tpu.core_type<tc>, window_params = [{transform_indices = @transform_0, window_bounds = array<i64: 4, 8, 128>}, {transform_indices = @transform_1, window_bounds = array<i64: 4, 8, 128>}, {transform_indices = @transform_2, window_bounds = array<i64: 8, 32, 128>}, {transform_indices = @transform_3, window_bounds = array<i64: 8, 32, 128>}, {transform_indices = @transform_4, window_bounds = array<i64: 1, 128>}]} {
    %c0 = arith.constant 0 : index
    %c0_0 = arith.constant 0 : index
    %c0_1 = arith.constant 0 : index
    %0 = vector.load %arg1[%c0, %c0_0, %c0_1] : memref<4x8x128xf32, #tpu.memory_space<vmem>>, vector<4x8x128xf32>
    %c0_2 = arith.constant 0 : index
    %c0_3 = arith.constant 0 : index
    %c0_4 = arith.constant 0 : index
    %1 = vector.load %arg2[%c0_2, %c0_3, %c0_4] : memref<4x8x128xf32, #tpu.memory_space<vmem>>, vector<4x8x128xf32>
    %c0_5 = arith.constant 0 : index
    %c0_6 = arith.constant 0 : index
    %c0_7 = arith.constant 0 : index
    %2 = vector.load %arg3[%c0_5, %c0_6, %c0_7] : memref<8x32x128xf32, #tpu.memory_space<vmem>>, vector<8x32x128xf32>
    %c0_8 = arith.constant 0 : index
    %c0_9 = arith.constant 0 : index
    %c0_10 = arith.constant 0 : index
    %3 = vector.load %arg4[%c0_8, %c0_9, %c0_10] : memref<8x32x128xf32, #tpu.memory_space<vmem>>, vector<8x32x128xf32>
    %4 = arith.cmpf one, %0, %1 : vector<4x8x128xf32>
    %cst = arith.constant 1.000000e+00 : f32
    %cst_11 = arith.constant 0.000000e+00 : f32
    %5 = vector.broadcast %cst : f32 to vector<4x8x128xf32>
    %6 = vector.broadcast %cst_11 : f32 to vector<4x8x128xf32>
    %7 = arith.select %4, %5, %6 : vector<4x8x128xi1>, vector<4x8x128xf32>
    %cst_12 = arith.constant dense<0xFF800000> : vector<8x128xf32>
    %8 = vector.multi_reduction <maximumf>, %7, %cst_12 [0] : vector<4x8x128xf32> to vector<8x128xf32>
    %cst_13 = arith.constant dense<0xFF800000> : vector<128xf32>
    %9 = vector.multi_reduction <maximumf>, %8, %cst_13 [0] : vector<8x128xf32> to vector<128xf32>
    %10 = vector.shape_cast %9 : vector<128xf32> to vector<1x128xf32>
    %11 = arith.cmpf one, %2, %3 : vector<8x32x128xf32>
    %cst_14 = arith.constant 1.000000e+00 : f32
    %cst_15 = arith.constant 0.000000e+00 : f32
    %12 = vector.broadcast %cst_14 : f32 to vector<8x32x128xf32>
    %13 = vector.broadcast %cst_15 : f32 to vector<8x32x128xf32>
    %14 = arith.select %11, %12, %13 : vector<8x32x128xi1>, vector<8x32x128xf32>
    %cst_16 = arith.constant dense<0xFF800000> : vector<32x128xf32>
    %15 = vector.multi_reduction <maximumf>, %14, %cst_16 [0] : vector<8x32x128xf32> to vector<32x128xf32>
    %cst_17 = arith.constant dense<0xFF800000> : vector<128xf32>
    %16 = vector.multi_reduction <maximumf>, %15, %cst_17 [0] : vector<32x128xf32> to vector<128xf32>
    %17 = vector.shape_cast %16 : vector<128xf32> to vector<1x128xf32>
    %18 = arith.maximumf %10, %17 : vector<1x128xf32>
    %19 = vector.extract_strided_slice %0 {offsets = [0, 0, 0], sizes = [1, 8, 128], strides = [1, 1, 1]} : vector<4x8x128xf32> to vector<1x8x128xf32>
    %20 = vector.shape_cast %19 : vector<1x8x128xf32> to vector<8x128xf32>
    %21 = vector.extract_strided_slice %0 {offsets = [1, 0, 0], sizes = [1, 8, 128], strides = [1, 1, 1]} : vector<4x8x128xf32> to vector<1x8x128xf32>
    %22 = vector.shape_cast %21 : vector<1x8x128xf32> to vector<8x128xf32>
    %23 = vector.extract_strided_slice %0 {offsets = [2, 0, 0], sizes = [1, 8, 128], strides = [1, 1, 1]} : vector<4x8x128xf32> to vector<1x8x128xf32>
    %24 = vector.shape_cast %23 : vector<1x8x128xf32> to vector<8x128xf32>
    %25 = vector.extract_strided_slice %0 {offsets = [3, 0, 0], sizes = [1, 8, 128], strides = [1, 1, 1]} : vector<4x8x128xf32> to vector<1x8x128xf32>
    %26 = vector.shape_cast %25 : vector<1x8x128xf32> to vector<8x128xf32>
    %27 = vector.extract_strided_slice %1 {offsets = [0, 0, 0], sizes = [1, 8, 128], strides = [1, 1, 1]} : vector<4x8x128xf32> to vector<1x8x128xf32>
    %28 = vector.shape_cast %27 : vector<1x8x128xf32> to vector<8x128xf32>
    %29 = vector.extract_strided_slice %1 {offsets = [1, 0, 0], sizes = [1, 8, 128], strides = [1, 1, 1]} : vector<4x8x128xf32> to vector<1x8x128xf32>
    %30 = vector.shape_cast %29 : vector<1x8x128xf32> to vector<8x128xf32>
    %31 = vector.extract_strided_slice %1 {offsets = [2, 0, 0], sizes = [1, 8, 128], strides = [1, 1, 1]} : vector<4x8x128xf32> to vector<1x8x128xf32>
    %32 = vector.shape_cast %31 : vector<1x8x128xf32> to vector<8x128xf32>
    %33 = vector.extract_strided_slice %1 {offsets = [3, 0, 0], sizes = [1, 8, 128], strides = [1, 1, 1]} : vector<4x8x128xf32> to vector<1x8x128xf32>
    %34 = vector.shape_cast %33 : vector<1x8x128xf32> to vector<8x128xf32>
    %35 = arith.mulf %20, %20 : vector<8x128xf32>
    %36 = arith.mulf %28, %28 : vector<8x128xf32>
    %37 = arith.mulf %22, %22 : vector<8x128xf32>
    %38 = arith.addf %35, %37 : vector<8x128xf32>
    %39 = arith.mulf %30, %30 : vector<8x128xf32>
    %40 = arith.addf %36, %39 : vector<8x128xf32>
    %41 = arith.mulf %24, %24 : vector<8x128xf32>
    %42 = arith.addf %38, %41 : vector<8x128xf32>
    %43 = arith.mulf %32, %32 : vector<8x128xf32>
    %44 = arith.addf %40, %43 : vector<8x128xf32>
    %45 = arith.mulf %26, %26 : vector<8x128xf32>
    %46 = arith.addf %42, %45 : vector<8x128xf32>
    %47 = arith.mulf %34, %34 : vector<8x128xf32>
    %48 = arith.addf %44, %47 : vector<8x128xf32>
    %49 = math.sqrt %46 : vector<8x128xf32>
    %cst_18 = arith.constant 9.99999993E-9 : f32
    %50 = vector.broadcast %cst_18 : f32 to vector<8x128xf32>
    %51 = arith.addf %49, %50 : vector<8x128xf32>
    %52 = tpu.reciprocal %51 {approx = true} : vector<8x128xf32> -> vector<8x128xf32>
    %53 = math.sqrt %48 : vector<8x128xf32>
    %cst_19 = arith.constant 9.99999993E-9 : f32
    %54 = vector.broadcast %cst_19 : f32 to vector<8x128xf32>
    %55 = arith.addf %53, %54 : vector<8x128xf32>
    %56 = tpu.reciprocal %55 {approx = true} : vector<8x128xf32> -> vector<8x128xf32>
    %57 = arith.mulf %20, %52 : vector<8x128xf32>
    %58 = arith.mulf %22, %52 : vector<8x128xf32>
    %59 = arith.mulf %24, %52 : vector<8x128xf32>
    %60 = arith.mulf %26, %52 : vector<8x128xf32>
    %61 = arith.mulf %28, %56 : vector<8x128xf32>
    %62 = arith.mulf %30, %56 : vector<8x128xf32>
    %63 = arith.mulf %32, %56 : vector<8x128xf32>
    %64 = arith.mulf %34, %56 : vector<8x128xf32>
    %65 = vector.extract_strided_slice %57 {offsets = [0, 0], sizes = [1, 128], strides = [1, 1]} : vector<8x128xf32> to vector<1x128xf32>
    %66 = vector.broadcast %65 : vector<1x128xf32> to vector<8x128xf32>
    %67 = arith.subf %66, %61 : vector<8x128xf32>
    %68 = arith.mulf %67, %67 : vector<8x128xf32>
    %69 = vector.extract_strided_slice %58 {offsets = [0, 0], sizes = [1, 128], strides = [1, 1]} : vector<8x128xf32> to vector<1x128xf32>
    %70 = vector.broadcast %69 : vector<1x128xf32> to vector<8x128xf32>
    %71 = arith.subf %70, %62 : vector<8x128xf32>
    %72 = arith.mulf %71, %71 : vector<8x128xf32>
    %73 = arith.addf %68, %72 : vector<8x128xf32>
    %74 = vector.extract_strided_slice %59 {offsets = [0, 0], sizes = [1, 128], strides = [1, 1]} : vector<8x128xf32> to vector<1x128xf32>
    %75 = vector.broadcast %74 : vector<1x128xf32> to vector<8x128xf32>
    %76 = arith.subf %75, %63 : vector<8x128xf32>
    %77 = arith.mulf %76, %76 : vector<8x128xf32>
    %78 = arith.addf %73, %77 : vector<8x128xf32>
    %79 = vector.extract_strided_slice %60 {offsets = [0, 0], sizes = [1, 128], strides = [1, 1]} : vector<8x128xf32> to vector<1x128xf32>
    %80 = vector.broadcast %79 : vector<1x128xf32> to vector<8x128xf32>
    %81 = arith.subf %80, %64 : vector<8x128xf32>
    %82 = arith.mulf %81, %81 : vector<8x128xf32>
    %83 = arith.addf %78, %82 : vector<8x128xf32>
    %84 = math.sqrt %83 : vector<8x128xf32>
    %85 = vector.extract_strided_slice %57 {offsets = [1, 0], sizes = [1, 128], strides = [1, 1]} : vector<8x128xf32> to vector<1x128xf32>
    %86 = vector.broadcast %85 : vector<1x128xf32> to vector<8x128xf32>
    %87 = arith.subf %86, %61 : vector<8x128xf32>
    %88 = arith.mulf %87, %87 : vector<8x128xf32>
    %89 = vector.extract_strided_slice %58 {offsets = [1, 0], sizes = [1, 128], strides = [1, 1]} : vector<8x128xf32> to vector<1x128xf32>
    %90 = vector.broadcast %89 : vector<1x128xf32> to vector<8x128xf32>
    %91 = arith.subf %90, %62 : vector<8x128xf32>
    %92 = arith.mulf %91, %91 : vector<8x128xf32>
    %93 = arith.addf %88, %92 : vector<8x128xf32>
    %94 = vector.extract_strided_slice %59 {offsets = [1, 0], sizes = [1, 128], strides = [1, 1]} : vector<8x128xf32> to vector<1x128xf32>
    %95 = vector.broadcast %94 : vector<1x128xf32> to vector<8x128xf32>
    %96 = arith.subf %95, %63 : vector<8x128xf32>
    %97 = arith.mulf %96, %96 : vector<8x128xf32>
    %98 = arith.addf %93, %97 : vector<8x128xf32>
    %99 = vector.extract_strided_slice %60 {offsets = [1, 0], sizes = [1, 128], strides = [1, 1]} : vector<8x128xf32> to vector<1x128xf32>
    %100 = vector.broadcast %99 : vector<1x128xf32> to vector<8x128xf32>
    %101 = arith.subf %100, %64 : vector<8x128xf32>
    %102 = arith.mulf %101, %101 : vector<8x128xf32>
    %103 = arith.addf %98, %102 : vector<8x128xf32>
    %104 = math.sqrt %103 : vector<8x128xf32>
    %105 = vector.extract_strided_slice %57 {offsets = [2, 0], sizes = [1, 128], strides = [1, 1]} : vector<8x128xf32> to vector<1x128xf32>
    %106 = vector.broadcast %105 : vector<1x128xf32> to vector<8x128xf32>
    %107 = arith.subf %106, %61 : vector<8x128xf32>
    %108 = arith.mulf %107, %107 : vector<8x128xf32>
    %109 = vector.extract_strided_slice %58 {offsets = [2, 0], sizes = [1, 128], strides = [1, 1]} : vector<8x128xf32> to vector<1x128xf32>
    %110 = vector.broadcast %109 : vector<1x128xf32> to vector<8x128xf32>
    %111 = arith.subf %110, %62 : vector<8x128xf32>
    %112 = arith.mulf %111, %111 : vector<8x128xf32>
    %113 = arith.addf %108, %112 : vector<8x128xf32>
    %114 = vector.extract_strided_slice %59 {offsets = [2, 0], sizes = [1, 128], strides = [1, 1]} : vector<8x128xf32> to vector<1x128xf32>
    %115 = vector.broadcast %114 : vector<1x128xf32> to vector<8x128xf32>
    %116 = arith.subf %115, %63 : vector<8x128xf32>
    %117 = arith.mulf %116, %116 : vector<8x128xf32>
    %118 = arith.addf %113, %117 : vector<8x128xf32>
    %119 = vector.extract_strided_slice %60 {offsets = [2, 0], sizes = [1, 128], strides = [1, 1]} : vector<8x128xf32> to vector<1x128xf32>
    %120 = vector.broadcast %119 : vector<1x128xf32> to vector<8x128xf32>
    %121 = arith.subf %120, %64 : vector<8x128xf32>
    %122 = arith.mulf %121, %121 : vector<8x128xf32>
    %123 = arith.addf %118, %122 : vector<8x128xf32>
    %124 = math.sqrt %123 : vector<8x128xf32>
    %125 = vector.extract_strided_slice %57 {offsets = [3, 0], sizes = [1, 128], strides = [1, 1]} : vector<8x128xf32> to vector<1x128xf32>
    %126 = vector.broadcast %125 : vector<1x128xf32> to vector<8x128xf32>
    %127 = arith.subf %126, %61 : vector<8x128xf32>
    %128 = arith.mulf %127, %127 : vector<8x128xf32>
    %129 = vector.extract_strided_slice %58 {offsets = [3, 0], sizes = [1, 128], strides = [1, 1]} : vector<8x128xf32> to vector<1x128xf32>
    %130 = vector.broadcast %129 : vector<1x128xf32> to vector<8x128xf32>
    %131 = arith.subf %130, %62 : vector<8x128xf32>
    %132 = arith.mulf %131, %131 : vector<8x128xf32>
    %133 = arith.addf %128, %132 : vector<8x128xf32>
    %134 = vector.extract_strided_slice %59 {offsets = [3, 0], sizes = [1, 128], strides = [1, 1]} : vector<8x128xf32> to vector<1x128xf32>
    %135 = vector.broadcast %134 : vector<1x128xf32> to vector<8x128xf32>
    %136 = arith.subf %135, %63 : vector<8x128xf32>
    %137 = arith.mulf %136, %136 : vector<8x128xf32>
    %138 = arith.addf %133, %137 : vector<8x128xf32>
    %139 = vector.extract_strided_slice %60 {offsets = [3, 0], sizes = [1, 128], strides = [1, 1]} : vector<8x128xf32> to vector<1x128xf32>
    %140 = vector.broadcast %139 : vector<1x128xf32> to vector<8x128xf32>
    %141 = arith.subf %140, %64 : vector<8x128xf32>
    %142 = arith.mulf %141, %141 : vector<8x128xf32>
    %143 = arith.addf %138, %142 : vector<8x128xf32>
    %144 = math.sqrt %143 : vector<8x128xf32>
    %145 = vector.extract_strided_slice %57 {offsets = [4, 0], sizes = [1, 128], strides = [1, 1]} : vector<8x128xf32> to vector<1x128xf32>
    %146 = vector.broadcast %145 : vector<1x128xf32> to vector<8x128xf32>
    %147 = arith.subf %146, %61 : vector<8x128xf32>
    %148 = arith.mulf %147, %147 : vector<8x128xf32>
    %149 = vector.extract_strided_slice %58 {offsets = [4, 0], sizes = [1, 128], strides = [1, 1]} : vector<8x128xf32> to vector<1x128xf32>
    %150 = vector.broadcast %149 : vector<1x128xf32> to vector<8x128xf32>
    %151 = arith.subf %150, %62 : vector<8x128xf32>
    %152 = arith.mulf %151, %151 : vector<8x128xf32>
    %153 = arith.addf %148, %152 : vector<8x128xf32>
    %154 = vector.extract_strided_slice %59 {offsets = [4, 0], sizes = [1, 128], strides = [1, 1]} : vector<8x128xf32> to vector<1x128xf32>
    %155 = vector.broadcast %154 : vector<1x128xf32> to vector<8x128xf32>
    %156 = arith.subf %155, %63 : vector<8x128xf32>
    %157 = arith.mulf %156, %156 : vector<8x128xf32>
    %158 = arith.addf %153, %157 : vector<8x128xf32>
    %159 = vector.extract_strided_slice %60 {offsets = [4, 0], sizes = [1, 128], strides = [1, 1]} : vector<8x128xf32> to vector<1x128xf32>
    %160 = vector.broadcast %159 : vector<1x128xf32> to vector<8x128xf32>
    %161 = arith.subf %160, %64 : vector<8x128xf32>
    %162 = arith.mulf %161, %161 : vector<8x128xf32>
    %163 = arith.addf %158, %162 : vector<8x128xf32>
    %164 = math.sqrt %163 : vector<8x128xf32>
    %165 = vector.extract_strided_slice %57 {offsets = [5, 0], sizes = [1, 128], strides = [1, 1]} : vector<8x128xf32> to vector<1x128xf32>
    %166 = vector.broadcast %165 : vector<1x128xf32> to vector<8x128xf32>
    %167 = arith.subf %166, %61 : vector<8x128xf32>
    %168 = arith.mulf %167, %167 : vector<8x128xf32>
    %169 = vector.extract_strided_slice %58 {offsets = [5, 0], sizes = [1, 128], strides = [1, 1]} : vector<8x128xf32> to vector<1x128xf32>
    %170 = vector.broadcast %169 : vector<1x128xf32> to vector<8x128xf32>
    %171 = arith.subf %170, %62 : vector<8x128xf32>
    %172 = arith.mulf %171, %171 : vector<8x128xf32>
    %173 = arith.addf %168, %172 : vector<8x128xf32>
    %174 = vector.extract_strided_slice %59 {offsets = [5, 0], sizes = [1, 128], strides = [1, 1]} : vector<8x128xf32> to vector<1x128xf32>
    %175 = vector.broadcast %174 : vector<1x128xf32> to vector<8x128xf32>
    %176 = arith.subf %175, %63 : vector<8x128xf32>
    %177 = arith.mulf %176, %176 : vector<8x128xf32>
    %178 = arith.addf %173, %177 : vector<8x128xf32>
    %179 = vector.extract_strided_slice %60 {offsets = [5, 0], sizes = [1, 128], strides = [1, 1]} : vector<8x128xf32> to vector<1x128xf32>
    %180 = vector.broadcast %179 : vector<1x128xf32> to vector<8x128xf32>
    %181 = arith.subf %180, %64 : vector<8x128xf32>
    %182 = arith.mulf %181, %181 : vector<8x128xf32>
    %183 = arith.addf %178, %182 : vector<8x128xf32>
    %184 = math.sqrt %183 : vector<8x128xf32>
    %185 = vector.extract_strided_slice %57 {offsets = [6, 0], sizes = [1, 128], strides = [1, 1]} : vector<8x128xf32> to vector<1x128xf32>
    %186 = vector.broadcast %185 : vector<1x128xf32> to vector<8x128xf32>
    %187 = arith.subf %186, %61 : vector<8x128xf32>
    %188 = arith.mulf %187, %187 : vector<8x128xf32>
    %189 = vector.extract_strided_slice %58 {offsets = [6, 0], sizes = [1, 128], strides = [1, 1]} : vector<8x128xf32> to vector<1x128xf32>
    %190 = vector.broadcast %189 : vector<1x128xf32> to vector<8x128xf32>
    %191 = arith.subf %190, %62 : vector<8x128xf32>
    %192 = arith.mulf %191, %191 : vector<8x128xf32>
    %193 = arith.addf %188, %192 : vector<8x128xf32>
    %194 = vector.extract_strided_slice %59 {offsets = [6, 0], sizes = [1, 128], strides = [1, 1]} : vector<8x128xf32> to vector<1x128xf32>
    %195 = vector.broadcast %194 : vector<1x128xf32> to vector<8x128xf32>
    %196 = arith.subf %195, %63 : vector<8x128xf32>
    %197 = arith.mulf %196, %196 : vector<8x128xf32>
    %198 = arith.addf %193, %197 : vector<8x128xf32>
    %199 = vector.extract_strided_slice %60 {offsets = [6, 0], sizes = [1, 128], strides = [1, 1]} : vector<8x128xf32> to vector<1x128xf32>
    %200 = vector.broadcast %199 : vector<1x128xf32> to vector<8x128xf32>
    %201 = arith.subf %200, %64 : vector<8x128xf32>
    %202 = arith.mulf %201, %201 : vector<8x128xf32>
    %203 = arith.addf %198, %202 : vector<8x128xf32>
    %204 = math.sqrt %203 : vector<8x128xf32>
    %205 = vector.extract_strided_slice %57 {offsets = [7, 0], sizes = [1, 128], strides = [1, 1]} : vector<8x128xf32> to vector<1x128xf32>
    %206 = vector.broadcast %205 : vector<1x128xf32> to vector<8x128xf32>
    %207 = arith.subf %206, %61 : vector<8x128xf32>
    %208 = arith.mulf %207, %207 : vector<8x128xf32>
    %209 = vector.extract_strided_slice %58 {offsets = [7, 0], sizes = [1, 128], strides = [1, 1]} : vector<8x128xf32> to vector<1x128xf32>
    %210 = vector.broadcast %209 : vector<1x128xf32> to vector<8x128xf32>
    %211 = arith.subf %210, %62 : vector<8x128xf32>
    %212 = arith.mulf %211, %211 : vector<8x128xf32>
    %213 = arith.addf %208, %212 : vector<8x128xf32>
    %214 = vector.extract_strided_slice %59 {offsets = [7, 0], sizes = [1, 128], strides = [1, 1]} : vector<8x128xf32> to vector<1x128xf32>
    %215 = vector.broadcast %214 : vector<1x128xf32> to vector<8x128xf32>
    %216 = arith.subf %215, %63 : vector<8x128xf32>
    %217 = arith.mulf %216, %216 : vector<8x128xf32>
    %218 = arith.addf %213, %217 : vector<8x128xf32>
    %219 = vector.extract_strided_slice %60 {offsets = [7, 0], sizes = [1, 128], strides = [1, 1]} : vector<8x128xf32> to vector<1x128xf32>
    %220 = vector.broadcast %219 : vector<1x128xf32> to vector<8x128xf32>
    %221 = arith.subf %220, %64 : vector<8x128xf32>
    %222 = arith.mulf %221, %221 : vector<8x128xf32>
    %223 = arith.addf %218, %222 : vector<8x128xf32>
    %224 = math.sqrt %223 : vector<8x128xf32>
    %225 = arith.maximumf %84, %104 : vector<8x128xf32>
    %226 = arith.maximumf %225, %124 : vector<8x128xf32>
    %227 = arith.maximumf %226, %144 : vector<8x128xf32>
    %228 = arith.maximumf %227, %164 : vector<8x128xf32>
    %229 = arith.maximumf %228, %184 : vector<8x128xf32>
    %230 = arith.maximumf %229, %204 : vector<8x128xf32>
    %231 = arith.maximumf %230, %224 : vector<8x128xf32>
    %cst_20 = arith.constant dense<0xFF800000> : vector<128xf32>
    %232 = vector.multi_reduction <maximumf>, %231, %cst_20 [0] : vector<8x128xf32> to vector<128xf32>
    %233 = vector.shape_cast %232 : vector<128xf32> to vector<1x128xf32>
    %cst_21 = arith.constant 9.99999993E-9 : f32
    %234 = vector.broadcast %cst_21 : f32 to vector<1x128xf32>
    %235 = arith.addf %233, %234 : vector<1x128xf32>
    %236 = tpu.reciprocal %235 {approx = true} : vector<1x128xf32> -> vector<1x128xf32>
    %237 = vector.broadcast %236 : vector<1x128xf32> to vector<8x128xf32>
    %238 = arith.mulf %84, %237 : vector<8x128xf32>
    %c0_22 = arith.constant 0 : index
    %c0_23 = arith.constant 0 : index
    %239 = vector.load %arg6[%c0_22, %c0_23] : memref<64x128xf32, #tpu.memory_space<vmem>>, vector<8x128xf32>
    tpu.vector_store %arg6[%c0_22, %c0_23], %238 {strides = array<i32>} : memref<64x128xf32, #tpu.memory_space<vmem>>, vector<8x128xf32>,
    %240 = vector.broadcast %236 : vector<1x128xf32> to vector<8x128xf32>
    %241 = arith.mulf %104, %240 : vector<8x128xf32>
    %c8 = arith.constant 8 : index
    %c0_24 = arith.constant 0 : index
    %242 = vector.load %arg6[%c8, %c0_24] : memref<64x128xf32, #tpu.memory_space<vmem>>, vector<8x128xf32>
    tpu.vector_store %arg6[%c8, %c0_24], %241 {strides = array<i32>} : memref<64x128xf32, #tpu.memory_space<vmem>>, vector<8x128xf32>,
    %243 = vector.broadcast %236 : vector<1x128xf32> to vector<8x128xf32>
    %244 = arith.mulf %124, %243 : vector<8x128xf32>
    %c16 = arith.constant 16 : index
    %c0_25 = arith.constant 0 : index
    %245 = vector.load %arg6[%c16, %c0_25] : memref<64x128xf32, #tpu.memory_space<vmem>>, vector<8x128xf32>
    tpu.vector_store %arg6[%c16, %c0_25], %244 {strides = array<i32>} : memref<64x128xf32, #tpu.memory_space<vmem>>, vector<8x128xf32>,
    %246 = vector.broadcast %236 : vector<1x128xf32> to vector<8x128xf32>
    %247 = arith.mulf %144, %246 : vector<8x128xf32>
    %c24 = arith.constant 24 : index
    %c0_26 = arith.constant 0 : index
    %248 = vector.load %arg6[%c24, %c0_26] : memref<64x128xf32, #tpu.memory_space<vmem>>, vector<8x128xf32>
    tpu.vector_store %arg6[%c24, %c0_26], %247 {strides = array<i32>} : memref<64x128xf32, #tpu.memory_space<vmem>>, vector<8x128xf32>,
    %249 = vector.broadcast %236 : vector<1x128xf32> to vector<8x128xf32>
    %250 = arith.mulf %164, %249 : vector<8x128xf32>
    %c32 = arith.constant 32 : index
    %c0_27 = arith.constant 0 : index
    %251 = vector.load %arg6[%c32, %c0_27] : memref<64x128xf32, #tpu.memory_space<vmem>>, vector<8x128xf32>
    tpu.vector_store %arg6[%c32, %c0_27], %250 {strides = array<i32>} : memref<64x128xf32, #tpu.memory_space<vmem>>, vector<8x128xf32>,
    %252 = vector.broadcast %236 : vector<1x128xf32> to vector<8x128xf32>
    %253 = arith.mulf %184, %252 : vector<8x128xf32>
    %c40 = arith.constant 40 : index
    %c0_28 = arith.constant 0 : index
    %254 = vector.load %arg6[%c40, %c0_28] : memref<64x128xf32, #tpu.memory_space<vmem>>, vector<8x128xf32>
    tpu.vector_store %arg6[%c40, %c0_28], %253 {strides = array<i32>} : memref<64x128xf32, #tpu.memory_space<vmem>>, vector<8x128xf32>,
    %255 = vector.broadcast %236 : vector<1x128xf32> to vector<8x128xf32>
    %256 = arith.mulf %204, %255 : vector<8x128xf32>
    %c48 = arith.constant 48 : index
    %c0_29 = arith.constant 0 : index
    %257 = vector.load %arg6[%c48, %c0_29] : memref<64x128xf32, #tpu.memory_space<vmem>>, vector<8x128xf32>
    tpu.vector_store %arg6[%c48, %c0_29], %256 {strides = array<i32>} : memref<64x128xf32, #tpu.memory_space<vmem>>, vector<8x128xf32>,
    %258 = vector.broadcast %236 : vector<1x128xf32> to vector<8x128xf32>
    %259 = arith.mulf %224, %258 : vector<8x128xf32>
    %c56 = arith.constant 56 : index
    %c0_30 = arith.constant 0 : index
    %260 = vector.load %arg6[%c56, %c0_30] : memref<64x128xf32, #tpu.memory_space<vmem>>, vector<8x128xf32>
    tpu.vector_store %arg6[%c56, %c0_30], %259 {strides = array<i32>} : memref<64x128xf32, #tpu.memory_space<vmem>>, vector<8x128xf32>,
    %c0_31 = arith.constant 0 : index
    %c0_32 = arith.constant 0 : index
    %261 = vector.load %arg6[%c0_31, %c0_32] : memref<64x128xf32, #tpu.memory_space<vmem>>, vector<1x128xf32>
    %c1 = arith.constant 1 : index
    %c0_33 = arith.constant 0 : index
    %262 = vector.load %arg6[%c1, %c0_33] : memref<64x128xf32, #tpu.memory_space<vmem>>, vector<1x128xf32>
    %263 = arith.addf %261, %262 : vector<1x128xf32>
    %c2 = arith.constant 2 : index
    %c0_34 = arith.constant 0 : index
    %264 = vector.load %arg6[%c2, %c0_34] : memref<64x128xf32, #tpu.memory_space<vmem>>, vector<1x128xf32>
    %265 = arith.addf %263, %264 : vector<1x128xf32>
    %c3 = arith.constant 3 : index
    %c0_35 = arith.constant 0 : index
    %266 = vector.load %arg6[%c3, %c0_35] : memref<64x128xf32, #tpu.memory_space<vmem>>, vector<1x128xf32>
    %267 = arith.addf %265, %266 : vector<1x128xf32>
    %c4 = arith.constant 4 : index
    %c0_36 = arith.constant 0 : index
    %268 = vector.load %arg6[%c4, %c0_36] : memref<64x128xf32, #tpu.memory_space<vmem>>, vector<1x128xf32>
    %269 = arith.addf %267, %268 : vector<1x128xf32>
    %c5 = arith.constant 5 : index
    %c0_37 = arith.constant 0 : index
    %270 = vector.load %arg6[%c5, %c0_37] : memref<64x128xf32, #tpu.memory_space<vmem>>, vector<1x128xf32>
    %271 = arith.addf %269, %270 : vector<1x128xf32>
    %c6 = arith.constant 6 : index
    %c0_38 = arith.constant 0 : index
    %272 = vector.load %arg6[%c6, %c0_38] : memref<64x128xf32, #tpu.memory_space<vmem>>, vector<1x128xf32>
    %273 = arith.addf %271, %272 : vector<1x128xf32>
    %c7 = arith.constant 7 : index
    %c0_39 = arith.constant 0 : index
    %274 = vector.load %arg6[%c7, %c0_39] : memref<64x128xf32, #tpu.memory_space<vmem>>, vector<1x128xf32>
    %275 = arith.addf %273, %274 : vector<1x128xf32>
    %c8_40 = arith.constant 8 : index
    %c0_41 = arith.constant 0 : index
    %276 = vector.load %arg6[%c8_40, %c0_41] : memref<64x128xf32, #tpu.memory_space<vmem>>, vector<1x128xf32>
    %277 = arith.addf %261, %276 : vector<1x128xf32>
    %278 = arith.minimumf %263, %277 : vector<1x128xf32>
    %279 = arith.minimumf %278, %261 : vector<1x128xf32>
    %c9 = arith.constant 9 : index
    %c0_42 = arith.constant 0 : index
    %280 = vector.load %arg6[%c9, %c0_42] : memref<64x128xf32, #tpu.memory_space<vmem>>, vector<1x128xf32>
    %281 = arith.addf %280, %279 : vector<1x128xf32>
    %282 = arith.minimumf %265, %281 : vector<1x128xf32>
    %283 = arith.minimumf %282, %263 : vector<1x128xf32>
    %c10 = arith.constant 10 : index
    %c0_43 = arith.constant 0 : index
    %284 = vector.load %arg6[%c10, %c0_43] : memref<64x128xf32, #tpu.memory_space<vmem>>, vector<1x128xf32>
    %285 = arith.addf %284, %283 : vector<1x128xf32>
    %286 = arith.minimumf %267, %285 : vector<1x128xf32>
    %287 = arith.minimumf %286, %265 : vector<1x128xf32>
    %c11 = arith.constant 11 : index
    %c0_44 = arith.constant 0 : index
    %288 = vector.load %arg6[%c11, %c0_44] : memref<64x128xf32, #tpu.memory_space<vmem>>, vector<1x128xf32>
    %289 = arith.addf %288, %287 : vector<1x128xf32>
    %290 = arith.minimumf %269, %289 : vector<1x128xf32>
    %291 = arith.minimumf %290, %267 : vector<1x128xf32>
    %c12 = arith.constant 12 : index
    %c0_45 = arith.constant 0 : index
    %292 = vector.load %arg6[%c12, %c0_45] : memref<64x128xf32, #tpu.memory_space<vmem>>, vector<1x128xf32>
    %293 = arith.addf %292, %291 : vector<1x128xf32>
    %294 = arith.minimumf %271, %293 : vector<1x128xf32>
    %295 = arith.minimumf %294, %269 : vector<1x128xf32>
    %c13 = arith.constant 13 : index
    %c0_46 = arith.constant 0 : index
    %296 = vector.load %arg6[%c13, %c0_46] : memref<64x128xf32, #tpu.memory_space<vmem>>, vector<1x128xf32>
    %297 = arith.addf %296, %295 : vector<1x128xf32>
    %298 = arith.minimumf %273, %297 : vector<1x128xf32>
    %299 = arith.minimumf %298, %271 : vector<1x128xf32>
    %c14 = arith.constant 14 : index
    %c0_47 = arith.constant 0 : index
    %300 = vector.load %arg6[%c14, %c0_47] : memref<64x128xf32, #tpu.memory_space<vmem>>, vector<1x128xf32>
    %301 = arith.addf %300, %299 : vector<1x128xf32>
    %302 = arith.minimumf %275, %301 : vector<1x128xf32>
    %303 = arith.minimumf %302, %273 : vector<1x128xf32>
    %c15 = arith.constant 15 : index
    %c0_48 = arith.constant 0 : index
    %304 = vector.load %arg6[%c15, %c0_48] : memref<64x128xf32, #tpu.memory_space<vmem>>, vector<1x128xf32>
    %305 = arith.addf %304, %303 : vector<1x128xf32>
    %c16_49 = arith.constant 16 : index
    %c0_50 = arith.constant 0 : index
    %306 = vector.load %arg6[%c16_49, %c0_50] : memref<64x128xf32, #tpu.memory_space<vmem>>, vector<1x128xf32>
    %307 = arith.addf %277, %306 : vector<1x128xf32>
    %308 = arith.minimumf %281, %307 : vector<1x128xf32>
    %309 = arith.minimumf %308, %277 : vector<1x128xf32>
    %c17 = arith.constant 17 : index
    %c0_51 = arith.constant 0 : index
    %310 = vector.load %arg6[%c17, %c0_51] : memref<64x128xf32, #tpu.memory_space<vmem>>, vector<1x128xf32>
    %311 = arith.addf %310, %309 : vector<1x128xf32>
    %312 = arith.minimumf %285, %311 : vector<1x128xf32>
    %313 = arith.minimumf %312, %281 : vector<1x128xf32>
    %c18 = arith.constant 18 : index
    %c0_52 = arith.constant 0 : index
    %314 = vector.load %arg6[%c18, %c0_52] : memref<64x128xf32, #tpu.memory_space<vmem>>, vector<1x128xf32>
    %315 = arith.addf %314, %313 : vector<1x128xf32>
    %316 = arith.minimumf %289, %315 : vector<1x128xf32>
    %317 = arith.minimumf %316, %285 : vector<1x128xf32>
    %c19 = arith.constant 19 : index
    %c0_53 = arith.constant 0 : index
    %318 = vector.load %arg6[%c19, %c0_53] : memref<64x128xf32, #tpu.memory_space<vmem>>, vector<1x128xf32>
    %319 = arith.addf %318, %317 : vector<1x128xf32>
    %320 = arith.minimumf %293, %319 : vector<1x128xf32>
    %321 = arith.minimumf %320, %289 : vector<1x128xf32>
    %c20 = arith.constant 20 : index
    %c0_54 = arith.constant 0 : index
    %322 = vector.load %arg6[%c20, %c0_54] : memref<64x128xf32, #tpu.memory_space<vmem>>, vector<1x128xf32>
    %323 = arith.addf %322, %321 : vector<1x128xf32>
    %324 = arith.minimumf %297, %323 : vector<1x128xf32>
    %325 = arith.minimumf %324, %293 : vector<1x128xf32>
    %c21 = arith.constant 21 : index
    %c0_55 = arith.constant 0 : index
    %326 = vector.load %arg6[%c21, %c0_55] : memref<64x128xf32, #tpu.memory_space<vmem>>, vector<1x128xf32>
    %327 = arith.addf %326, %325 : vector<1x128xf32>
    %328 = arith.minimumf %301, %327 : vector<1x128xf32>
    %329 = arith.minimumf %328, %297 : vector<1x128xf32>
    %c22 = arith.constant 22 : index
    %c0_56 = arith.constant 0 : index
    %330 = vector.load %arg6[%c22, %c0_56] : memref<64x128xf32, #tpu.memory_space<vmem>>, vector<1x128xf32>
    %331 = arith.addf %330, %329 : vector<1x128xf32>
    %332 = arith.minimumf %305, %331 : vector<1x128xf32>
    %333 = arith.minimumf %332, %301 : vector<1x128xf32>
    %c23 = arith.constant 23 : index
    %c0_57 = arith.constant 0 : index
    %334 = vector.load %arg6[%c23, %c0_57] : memref<64x128xf32, #tpu.memory_space<vmem>>, vector<1x128xf32>
    %335 = arith.addf %334, %333 : vector<1x128xf32>
    %c24_58 = arith.constant 24 : index
    %c0_59 = arith.constant 0 : index
    %336 = vector.load %arg6[%c24_58, %c0_59] : memref<64x128xf32, #tpu.memory_space<vmem>>, vector<1x128xf32>
    %337 = arith.addf %307, %336 : vector<1x128xf32>
    %338 = arith.minimumf %311, %337 : vector<1x128xf32>
    %339 = arith.minimumf %338, %307 : vector<1x128xf32>
    %c25 = arith.constant 25 : index
    %c0_60 = arith.constant 0 : index
    %340 = vector.load %arg6[%c25, %c0_60] : memref<64x128xf32, #tpu.memory_space<vmem>>, vector<1x128xf32>
    %341 = arith.addf %340, %339 : vector<1x128xf32>
    %342 = arith.minimumf %315, %341 : vector<1x128xf32>
    %343 = arith.minimumf %342, %311 : vector<1x128xf32>
    %c26 = arith.constant 26 : index
    %c0_61 = arith.constant 0 : index
    %344 = vector.load %arg6[%c26, %c0_61] : memref<64x128xf32, #tpu.memory_space<vmem>>, vector<1x128xf32>
    %345 = arith.addf %344, %343 : vector<1x128xf32>
    %346 = arith.minimumf %319, %345 : vector<1x128xf32>
    %347 = arith.minimumf %346, %315 : vector<1x128xf32>
    %c27 = arith.constant 27 : index
    %c0_62 = arith.constant 0 : index
    %348 = vector.load %arg6[%c27, %c0_62] : memref<64x128xf32, #tpu.memory_space<vmem>>, vector<1x128xf32>
    %349 = arith.addf %348, %347 : vector<1x128xf32>
    %350 = arith.minimumf %323, %349 : vector<1x128xf32>
    %351 = arith.minimumf %350, %319 : vector<1x128xf32>
    %c28 = arith.constant 28 : index
    %c0_63 = arith.constant 0 : index
    %352 = vector.load %arg6[%c28, %c0_63] : memref<64x128xf32, #tpu.memory_space<vmem>>, vector<1x128xf32>
    %353 = arith.addf %352, %351 : vector<1x128xf32>
    %354 = arith.minimumf %327, %353 : vector<1x128xf32>
    %355 = arith.minimumf %354, %323 : vector<1x128xf32>
    %c29 = arith.constant 29 : index
    %c0_64 = arith.constant 0 : index
    %356 = vector.load %arg6[%c29, %c0_64] : memref<64x128xf32, #tpu.memory_space<vmem>>, vector<1x128xf32>
    %357 = arith.addf %356, %355 : vector<1x128xf32>
    %358 = arith.minimumf %331, %357 : vector<1x128xf32>
    %359 = arith.minimumf %358, %327 : vector<1x128xf32>
    %c30 = arith.constant 30 : index
    %c0_65 = arith.constant 0 : index
    %360 = vector.load %arg6[%c30, %c0_65] : memref<64x128xf32, #tpu.memory_space<vmem>>, vector<1x128xf32>
    %361 = arith.addf %360, %359 : vector<1x128xf32>
    %362 = arith.minimumf %335, %361 : vector<1x128xf32>
    %363 = arith.minimumf %362, %331 : vector<1x128xf32>
    %c31 = arith.constant 31 : index
    %c0_66 = arith.constant 0 : index
    %364 = vector.load %arg6[%c31, %c0_66] : memref<64x128xf32, #tpu.memory_space<vmem>>, vector<1x128xf32>
    %365 = arith.addf %364, %363 : vector<1x128xf32>
    %c32_67 = arith.constant 32 : index
    %c0_68 = arith.constant 0 : index
    %366 = vector.load %arg6[%c32_67, %c0_68] : memref<64x128xf32, #tpu.memory_space<vmem>>, vector<1x128xf32>
    %367 = arith.addf %337, %366 : vector<1x128xf32>
    %368 = arith.minimumf %341, %367 : vector<1x128xf32>
    %369 = arith.minimumf %368, %337 : vector<1x128xf32>
    %c33 = arith.constant 33 : index
    %c0_69 = arith.constant 0 : index
    %370 = vector.load %arg6[%c33, %c0_69] : memref<64x128xf32, #tpu.memory_space<vmem>>, vector<1x128xf32>
    %371 = arith.addf %370, %369 : vector<1x128xf32>
    %372 = arith.minimumf %345, %371 : vector<1x128xf32>
    %373 = arith.minimumf %372, %341 : vector<1x128xf32>
    %c34 = arith.constant 34 : index
    %c0_70 = arith.constant 0 : index
    %374 = vector.load %arg6[%c34, %c0_70] : memref<64x128xf32, #tpu.memory_space<vmem>>, vector<1x128xf32>
    %375 = arith.addf %374, %373 : vector<1x128xf32>
    %376 = arith.minimumf %349, %375 : vector<1x128xf32>
    %377 = arith.minimumf %376, %345 : vector<1x128xf32>
    %c35 = arith.constant 35 : index
    %c0_71 = arith.constant 0 : index
    %378 = vector.load %arg6[%c35, %c0_71] : memref<64x128xf32, #tpu.memory_space<vmem>>, vector<1x128xf32>
    %379 = arith.addf %378, %377 : vector<1x128xf32>
    %380 = arith.minimumf %353, %379 : vector<1x128xf32>
    %381 = arith.minimumf %380, %349 : vector<1x128xf32>
    %c36 = arith.constant 36 : index
    %c0_72 = arith.constant 0 : index
    %382 = vector.load %arg6[%c36, %c0_72] : memref<64x128xf32, #tpu.memory_space<vmem>>, vector<1x128xf32>
    %383 = arith.addf %382, %381 : vector<1x128xf32>
    %384 = arith.minimumf %357, %383 : vector<1x128xf32>
    %385 = arith.minimumf %384, %353 : vector<1x128xf32>
    %c37 = arith.constant 37 : index
    %c0_73 = arith.constant 0 : index
    %386 = vector.load %arg6[%c37, %c0_73] : memref<64x128xf32, #tpu.memory_space<vmem>>, vector<1x128xf32>
    %387 = arith.addf %386, %385 : vector<1x128xf32>
    %388 = arith.minimumf %361, %387 : vector<1x128xf32>
    %389 = arith.minimumf %388, %357 : vector<1x128xf32>
    %c38 = arith.constant 38 : index
    %c0_74 = arith.constant 0 : index
    %390 = vector.load %arg6[%c38, %c0_74] : memref<64x128xf32, #tpu.memory_space<vmem>>, vector<1x128xf32>
    %391 = arith.addf %390, %389 : vector<1x128xf32>
    %392 = arith.minimumf %365, %391 : vector<1x128xf32>
    %393 = arith.minimumf %392, %361 : vector<1x128xf32>
    %c39 = arith.constant 39 : index
    %c0_75 = arith.constant 0 : index
    %394 = vector.load %arg6[%c39, %c0_75] : memref<64x128xf32, #tpu.memory_space<vmem>>, vector<1x128xf32>
    %395 = arith.addf %394, %393 : vector<1x128xf32>
    %c40_76 = arith.constant 40 : index
    %c0_77 = arith.constant 0 : index
    %396 = vector.load %arg6[%c40_76, %c0_77] : memref<64x128xf32, #tpu.memory_space<vmem>>, vector<1x128xf32>
    %397 = arith.addf %367, %396 : vector<1x128xf32>
    %398 = arith.minimumf %371, %397 : vector<1x128xf32>
    %399 = arith.minimumf %398, %367 : vector<1x128xf32>
    %c41 = arith.constant 41 : index
    %c0_78 = arith.constant 0 : index
    %400 = vector.load %arg6[%c41, %c0_78] : memref<64x128xf32, #tpu.memory_space<vmem>>, vector<1x128xf32>
    %401 = arith.addf %400, %399 : vector<1x128xf32>
    %402 = arith.minimumf %375, %401 : vector<1x128xf32>
    %403 = arith.minimumf %402, %371 : vector<1x128xf32>
    %c42 = arith.constant 42 : index
    %c0_79 = arith.constant 0 : index
    %404 = vector.load %arg6[%c42, %c0_79] : memref<64x128xf32, #tpu.memory_space<vmem>>, vector<1x128xf32>
    %405 = arith.addf %404, %403 : vector<1x128xf32>
    %406 = arith.minimumf %379, %405 : vector<1x128xf32>
    %407 = arith.minimumf %406, %375 : vector<1x128xf32>
    %c43 = arith.constant 43 : index
    %c0_80 = arith.constant 0 : index
    %408 = vector.load %arg6[%c43, %c0_80] : memref<64x128xf32, #tpu.memory_space<vmem>>, vector<1x128xf32>
    %409 = arith.addf %408, %407 : vector<1x128xf32>
    %410 = arith.minimumf %383, %409 : vector<1x128xf32>
    %411 = arith.minimumf %410, %379 : vector<1x128xf32>
    %c44 = arith.constant 44 : index
    %c0_81 = arith.constant 0 : index
    %412 = vector.load %arg6[%c44, %c0_81] : memref<64x128xf32, #tpu.memory_space<vmem>>, vector<1x128xf32>
    %413 = arith.addf %412, %411 : vector<1x128xf32>
    %414 = arith.minimumf %387, %413 : vector<1x128xf32>
    %415 = arith.minimumf %414, %383 : vector<1x128xf32>
    %c45 = arith.constant 45 : index
    %c0_82 = arith.constant 0 : index
    %416 = vector.load %arg6[%c45, %c0_82] : memref<64x128xf32, #tpu.memory_space<vmem>>, vector<1x128xf32>
    %417 = arith.addf %416, %415 : vector<1x128xf32>
    %418 = arith.minimumf %391, %417 : vector<1x128xf32>
    %419 = arith.minimumf %418, %387 : vector<1x128xf32>
    %c46 = arith.constant 46 : index
    %c0_83 = arith.constant 0 : index
    %420 = vector.load %arg6[%c46, %c0_83] : memref<64x128xf32, #tpu.memory_space<vmem>>, vector<1x128xf32>
    %421 = arith.addf %420, %419 : vector<1x128xf32>
    %422 = arith.minimumf %395, %421 : vector<1x128xf32>
    %423 = arith.minimumf %422, %391 : vector<1x128xf32>
    %c47 = arith.constant 47 : index
    %c0_84 = arith.constant 0 : index
    %424 = vector.load %arg6[%c47, %c0_84] : memref<64x128xf32, #tpu.memory_space<vmem>>, vector<1x128xf32>
    %425 = arith.addf %424, %423 : vector<1x128xf32>
    %c48_85 = arith.constant 48 : index
    %c0_86 = arith.constant 0 : index
    %426 = vector.load %arg6[%c48_85, %c0_86] : memref<64x128xf32, #tpu.memory_space<vmem>>, vector<1x128xf32>
    %427 = arith.addf %397, %426 : vector<1x128xf32>
    %428 = arith.minimumf %401, %427 : vector<1x128xf32>
    %429 = arith.minimumf %428, %397 : vector<1x128xf32>
    %c49 = arith.constant 49 : index
    %c0_87 = arith.constant 0 : index
    %430 = vector.load %arg6[%c49, %c0_87] : memref<64x128xf32, #tpu.memory_space<vmem>>, vector<1x128xf32>
    %431 = arith.addf %430, %429 : vector<1x128xf32>
    %432 = arith.minimumf %405, %431 : vector<1x128xf32>
    %433 = arith.minimumf %432, %401 : vector<1x128xf32>
    %c50 = arith.constant 50 : index
    %c0_88 = arith.constant 0 : index
    %434 = vector.load %arg6[%c50, %c0_88] : memref<64x128xf32, #tpu.memory_space<vmem>>, vector<1x128xf32>
    %435 = arith.addf %434, %433 : vector<1x128xf32>
    %436 = arith.minimumf %409, %435 : vector<1x128xf32>
    %437 = arith.minimumf %436, %405 : vector<1x128xf32>
    %c51 = arith.constant 51 : index
    %c0_89 = arith.constant 0 : index
    %438 = vector.load %arg6[%c51, %c0_89] : memref<64x128xf32, #tpu.memory_space<vmem>>, vector<1x128xf32>
    %439 = arith.addf %438, %437 : vector<1x128xf32>
    %440 = arith.minimumf %413, %439 : vector<1x128xf32>
    %441 = arith.minimumf %440, %409 : vector<1x128xf32>
    %c52 = arith.constant 52 : index
    %c0_90 = arith.constant 0 : index
    %442 = vector.load %arg6[%c52, %c0_90] : memref<64x128xf32, #tpu.memory_space<vmem>>, vector<1x128xf32>
    %443 = arith.addf %442, %441 : vector<1x128xf32>
    %444 = arith.minimumf %417, %443 : vector<1x128xf32>
    %445 = arith.minimumf %444, %413 : vector<1x128xf32>
    %c53 = arith.constant 53 : index
    %c0_91 = arith.constant 0 : index
    %446 = vector.load %arg6[%c53, %c0_91] : memref<64x128xf32, #tpu.memory_space<vmem>>, vector<1x128xf32>
    %447 = arith.addf %446, %445 : vector<1x128xf32>
    %448 = arith.minimumf %421, %447 : vector<1x128xf32>
    %449 = arith.minimumf %448, %417 : vector<1x128xf32>
    %c54 = arith.constant 54 : index
    %c0_92 = arith.constant 0 : index
    %450 = vector.load %arg6[%c54, %c0_92] : memref<64x128xf32, #tpu.memory_space<vmem>>, vector<1x128xf32>
    %451 = arith.addf %450, %449 : vector<1x128xf32>
    %452 = arith.minimumf %425, %451 : vector<1x128xf32>
    %453 = arith.minimumf %452, %421 : vector<1x128xf32>
    %c55 = arith.constant 55 : index
    %c0_93 = arith.constant 0 : index
    %454 = vector.load %arg6[%c55, %c0_93] : memref<64x128xf32, #tpu.memory_space<vmem>>, vector<1x128xf32>
    %455 = arith.addf %454, %453 : vector<1x128xf32>
    %c56_94 = arith.constant 56 : index
    %c0_95 = arith.constant 0 : index
    %456 = vector.load %arg6[%c56_94, %c0_95] : memref<64x128xf32, #tpu.memory_space<vmem>>, vector<1x128xf32>
    %457 = arith.addf %427, %456 : vector<1x128xf32>
    %458 = arith.minimumf %431, %457 : vector<1x128xf32>
    %459 = arith.minimumf %458, %427 : vector<1x128xf32>
    %c57 = arith.constant 57 : index
    %c0_96 = arith.constant 0 : index
    %460 = vector.load %arg6[%c57, %c0_96] : memref<64x128xf32, #tpu.memory_space<vmem>>, vector<1x128xf32>
    %461 = arith.addf %460, %459 : vector<1x128xf32>
    %462 = arith.minimumf %435, %461 : vector<1x128xf32>
    %463 = arith.minimumf %462, %431 : vector<1x128xf32>
    %c58 = arith.constant 58 : index
    %c0_97 = arith.constant 0 : index
    %464 = vector.load %arg6[%c58, %c0_97] : memref<64x128xf32, #tpu.memory_space<vmem>>, vector<1x128xf32>
    %465 = arith.addf %464, %463 : vector<1x128xf32>
    %466 = arith.minimumf %439, %465 : vector<1x128xf32>
    %467 = arith.minimumf %466, %435 : vector<1x128xf32>
    %c59 = arith.constant 59 : index
    %c0_98 = arith.constant 0 : index
    %468 = vector.load %arg6[%c59, %c0_98] : memref<64x128xf32, #tpu.memory_space<vmem>>, vector<1x128xf32>
    %469 = arith.addf %468, %467 : vector<1x128xf32>
    %470 = arith.minimumf %443, %469 : vector<1x128xf32>
    %471 = arith.minimumf %470, %439 : vector<1x128xf32>
    %c60 = arith.constant 60 : index
    %c0_99 = arith.constant 0 : index
    %472 = vector.load %arg6[%c60, %c0_99] : memref<64x128xf32, #tpu.memory_space<vmem>>, vector<1x128xf32>
    %473 = arith.addf %472, %471 : vector<1x128xf32>
    %474 = arith.minimumf %447, %473 : vector<1x128xf32>
    %475 = arith.minimumf %474, %443 : vector<1x128xf32>
    %c61 = arith.constant 61 : index
    %c0_100 = arith.constant 0 : index
    %476 = vector.load %arg6[%c61, %c0_100] : memref<64x128xf32, #tpu.memory_space<vmem>>, vector<1x128xf32>
    %477 = arith.addf %476, %475 : vector<1x128xf32>
    %478 = arith.minimumf %451, %477 : vector<1x128xf32>
    %479 = arith.minimumf %478, %447 : vector<1x128xf32>
    %c62 = arith.constant 62 : index
    %c0_101 = arith.constant 0 : index
    %480 = vector.load %arg6[%c62, %c0_101] : memref<64x128xf32, #tpu.memory_space<vmem>>, vector<1x128xf32>
    %481 = arith.addf %480, %479 : vector<1x128xf32>
    %482 = arith.minimumf %455, %481 : vector<1x128xf32>
    %483 = arith.minimumf %482, %451 : vector<1x128xf32>
    %c63 = arith.constant 63 : index
    %c0_102 = arith.constant 0 : index
    %484 = vector.load %arg6[%c63, %c0_102] : memref<64x128xf32, #tpu.memory_space<vmem>>, vector<1x128xf32>
    %485 = arith.addf %484, %483 : vector<1x128xf32>
    %486 = math.absf %485 : vector<1x128xf32>
    %487 = arith.subf %2, %3 : vector<8x32x128xf32>
    %488 = arith.mulf %487, %487 : vector<8x32x128xf32>
    %cst_103 = arith.constant dense<0.000000e+00> : vector<32x128xf32>
    %489 = vector.multi_reduction <add>, %488, %cst_103 [0] : vector<8x32x128xf32> to vector<32x128xf32>
    %cst_104 = arith.constant dense<0.000000e+00> : vector<128xf32>
    %490 = vector.multi_reduction <add>, %489, %cst_104 [0] : vector<32x128xf32> to vector<128xf32>
    %491 = vector.shape_cast %490 : vector<128xf32> to vector<1x128xf32>
    %492 = math.sqrt %491 : vector<1x128xf32>
    %cst_105 = arith.constant 1.250000e-01 : f32
    %493 = vector.broadcast %cst_105 : f32 to vector<1x128xf32>
    %494 = arith.mulf %492, %493 : vector<1x128xf32>
    %cst_106 = arith.constant dense<0.000000e+00> : vector<32x128xf32>
    %495 = vector.multi_reduction <add>, %2, %cst_106 [0] : vector<8x32x128xf32> to vector<32x128xf32>
    %496 = vector.shape_cast %495 : vector<32x128xf32> to vector<1x32x128xf32>
    %cst_107 = arith.constant 8.000000e+00 : f32
    %497 = vector.broadcast %cst_107 : f32 to vector<1x32x128xf32>
    %498 = arith.divf %496, %497 : vector<1x32x128xf32>
    %499 = vector.broadcast %498 : vector<1x32x128xf32> to vector<8x32x128xf32>
    %500 = arith.subf %2, %499 : vector<8x32x128xf32>
    %501 = vector.extract_strided_slice %500 {offsets = [0, 0, 0], sizes = [7, 32, 128], strides = [1, 1, 1]} : vector<8x32x128xf32> to vector<7x32x128xf32>
    %502 = vector.extract_strided_slice %500 {offsets = [1, 0, 0], sizes = [7, 32, 128], strides = [1, 1, 1]} : vector<8x32x128xf32> to vector<7x32x128xf32>
    %503 = arith.mulf %501, %502 : vector<7x32x128xf32>
    %cst_108 = arith.constant dense<0.000000e+00> : vector<32x128xf32>
    %504 = vector.multi_reduction <add>, %503, %cst_108 [0] : vector<7x32x128xf32> to vector<32x128xf32>
    %505 = vector.extract_strided_slice %500 {offsets = [0, 0, 0], sizes = [6, 32, 128], strides = [1, 1, 1]} : vector<8x32x128xf32> to vector<6x32x128xf32>
    %506 = vector.extract_strided_slice %500 {offsets = [2, 0, 0], sizes = [6, 32, 128], strides = [1, 1, 1]} : vector<8x32x128xf32> to vector<6x32x128xf32>
    %507 = arith.mulf %505, %506 : vector<6x32x128xf32>
    %cst_109 = arith.constant dense<0.000000e+00> : vector<32x128xf32>
    %508 = vector.multi_reduction <add>, %507, %cst_109 [0] : vector<6x32x128xf32> to vector<32x128xf32>
    %509 = vector.extract_strided_slice %500 {offsets = [0, 0, 0], sizes = [5, 32, 128], strides = [1, 1, 1]} : vector<8x32x128xf32> to vector<5x32x128xf32>
    %510 = vector.extract_strided_slice %500 {offsets = [3, 0, 0], sizes = [5, 32, 128], strides = [1, 1, 1]} : vector<8x32x128xf32> to vector<5x32x128xf32>
    %511 = arith.mulf %509, %510 : vector<5x32x128xf32>
    %cst_110 = arith.constant dense<0.000000e+00> : vector<32x128xf32>
    %512 = vector.multi_reduction <add>, %511, %cst_110 [0] : vector<5x32x128xf32> to vector<32x128xf32>
    %513 = vector.extract_strided_slice %500 {offsets = [0, 0, 0], sizes = [4, 32, 128], strides = [1, 1, 1]} : vector<8x32x128xf32> to vector<4x32x128xf32>
    %514 = vector.extract_strided_slice %500 {offsets = [4, 0, 0], sizes = [4, 32, 128], strides = [1, 1, 1]} : vector<8x32x128xf32> to vector<4x32x128xf32>
    %515 = arith.mulf %513, %514 : vector<4x32x128xf32>
    %cst_111 = arith.constant dense<0.000000e+00> : vector<32x128xf32>
    %516 = vector.multi_reduction <add>, %515, %cst_111 [0] : vector<4x32x128xf32> to vector<32x128xf32>
    %517 = vector.extract_strided_slice %500 {offsets = [0, 0, 0], sizes = [3, 32, 128], strides = [1, 1, 1]} : vector<8x32x128xf32> to vector<3x32x128xf32>
    %518 = vector.extract_strided_slice %500 {offsets = [5, 0, 0], sizes = [3, 32, 128], strides = [1, 1, 1]} : vector<8x32x128xf32> to vector<3x32x128xf32>
    %519 = arith.mulf %517, %518 : vector<3x32x128xf32>
    %cst_112 = arith.constant dense<0.000000e+00> : vector<32x128xf32>
    %520 = vector.multi_reduction <add>, %519, %cst_112 [0] : vector<3x32x128xf32> to vector<32x128xf32>
    %cst_113 = arith.constant dense<0.000000e+00> : vector<32x128xf32>
    %521 = vector.multi_reduction <add>, %3, %cst_113 [0] : vector<8x32x128xf32> to vector<32x128xf32>
    %522 = vector.shape_cast %521 : vector<32x128xf32> to vector<1x32x128xf32>
    %cst_114 = arith.constant 8.000000e+00 : f32
    %523 = vector.broadcast %cst_114 : f32 to vector<1x32x128xf32>
    %524 = arith.divf %522, %523 : vector<1x32x128xf32>
    %525 = vector.broadcast %524 : vector<1x32x128xf32> to vector<8x32x128xf32>
    %526 = arith.subf %3, %525 : vector<8x32x128xf32>
    %527 = vector.extract_strided_slice %526 {offsets = [0, 0, 0], sizes = [7, 32, 128], strides = [1, 1, 1]} : vector<8x32x128xf32> to vector<7x32x128xf32>
    %528 = vector.extract_strided_slice %526 {offsets = [1, 0, 0], sizes = [7, 32, 128], strides = [1, 1, 1]} : vector<8x32x128xf32> to vector<7x32x128xf32>
    %529 = arith.mulf %527, %528 : vector<7x32x128xf32>
    %cst_115 = arith.constant dense<0.000000e+00> : vector<32x128xf32>
    %530 = vector.multi_reduction <add>, %529, %cst_115 [0] : vector<7x32x128xf32> to vector<32x128xf32>
    %531 = vector.extract_strided_slice %526 {offsets = [0, 0, 0], sizes = [6, 32, 128], strides = [1, 1, 1]} : vector<8x32x128xf32> to vector<6x32x128xf32>
    %532 = vector.extract_strided_slice %526 {offsets = [2, 0, 0], sizes = [6, 32, 128], strides = [1, 1, 1]} : vector<8x32x128xf32> to vector<6x32x128xf32>
    %533 = arith.mulf %531, %532 : vector<6x32x128xf32>
    %cst_116 = arith.constant dense<0.000000e+00> : vector<32x128xf32>
    %534 = vector.multi_reduction <add>, %533, %cst_116 [0] : vector<6x32x128xf32> to vector<32x128xf32>
    %535 = vector.extract_strided_slice %526 {offsets = [0, 0, 0], sizes = [5, 32, 128], strides = [1, 1, 1]} : vector<8x32x128xf32> to vector<5x32x128xf32>
    %536 = vector.extract_strided_slice %526 {offsets = [3, 0, 0], sizes = [5, 32, 128], strides = [1, 1, 1]} : vector<8x32x128xf32> to vector<5x32x128xf32>
    %537 = arith.mulf %535, %536 : vector<5x32x128xf32>
    %cst_117 = arith.constant dense<0.000000e+00> : vector<32x128xf32>
    %538 = vector.multi_reduction <add>, %537, %cst_117 [0] : vector<5x32x128xf32> to vector<32x128xf32>
    %539 = vector.extract_strided_slice %526 {offsets = [0, 0, 0], sizes = [4, 32, 128], strides = [1, 1, 1]} : vector<8x32x128xf32> to vector<4x32x128xf32>
    %540 = vector.extract_strided_slice %526 {offsets = [4, 0, 0], sizes = [4, 32, 128], strides = [1, 1, 1]} : vector<8x32x128xf32> to vector<4x32x128xf32>
    %541 = arith.mulf %539, %540 : vector<4x32x128xf32>
    %cst_118 = arith.constant dense<0.000000e+00> : vector<32x128xf32>
    %542 = vector.multi_reduction <add>, %541, %cst_118 [0] : vector<4x32x128xf32> to vector<32x128xf32>
    %543 = vector.extract_strided_slice %526 {offsets = [0, 0, 0], sizes = [3, 32, 128], strides = [1, 1, 1]} : vector<8x32x128xf32> to vector<3x32x128xf32>
    %544 = vector.extract_strided_slice %526 {offsets = [5, 0, 0], sizes = [3, 32, 128], strides = [1, 1, 1]} : vector<8x32x128xf32> to vector<3x32x128xf32>
    %545 = arith.mulf %543, %544 : vector<3x32x128xf32>
    %cst_119 = arith.constant dense<0.000000e+00> : vector<32x128xf32>
    %546 = vector.multi_reduction <add>, %545, %cst_119 [0] : vector<3x32x128xf32> to vector<32x128xf32>
    %547 = math.absf %504 : vector<32x128xf32>
    %548 = math.absf %530 : vector<32x128xf32>
    %549 = math.absf %508 : vector<32x128xf32>
    %550 = arith.maximumf %547, %549 : vector<32x128xf32>
    %551 = math.absf %534 : vector<32x128xf32>
    %552 = arith.maximumf %548, %551 : vector<32x128xf32>
    %553 = math.absf %512 : vector<32x128xf32>
    %554 = arith.maximumf %550, %553 : vector<32x128xf32>
    %555 = math.absf %538 : vector<32x128xf32>
    %556 = arith.maximumf %552, %555 : vector<32x128xf32>
    %557 = math.absf %516 : vector<32x128xf32>
    %558 = arith.maximumf %554, %557 : vector<32x128xf32>
    %559 = math.absf %542 : vector<32x128xf32>
    %560 = arith.maximumf %556, %559 : vector<32x128xf32>
    %561 = math.absf %520 : vector<32x128xf32>
    %562 = arith.maximumf %558, %561 : vector<32x128xf32>
    %563 = math.absf %546 : vector<32x128xf32>
    %564 = arith.maximumf %560, %563 : vector<32x128xf32>
    %565 = tpu.reciprocal %562 {approx = true} : vector<32x128xf32> -> vector<32x128xf32>
    %566 = tpu.reciprocal %564 {approx = true} : vector<32x128xf32> -> vector<32x128xf32>
    %567 = arith.mulf %504, %565 : vector<32x128xf32>
    %568 = arith.mulf %530, %566 : vector<32x128xf32>
    %569 = arith.subf %567, %568 : vector<32x128xf32>
    %570 = math.absf %569 : vector<32x128xf32>
    %571 = arith.mulf %508, %565 : vector<32x128xf32>
    %572 = arith.mulf %534, %566 : vector<32x128xf32>
    %573 = arith.subf %571, %572 : vector<32x128xf32>
    %574 = math.absf %573 : vector<32x128xf32>
    %575 = arith.addf %570, %574 : vector<32x128xf32>
    %576 = arith.mulf %512, %565 : vector<32x128xf32>
    %577 = arith.mulf %538, %566 : vector<32x128xf32>
    %578 = arith.subf %576, %577 : vector<32x128xf32>
    %579 = math.absf %578 : vector<32x128xf32>
    %580 = arith.addf %575, %579 : vector<32x128xf32>
    %581 = arith.mulf %516, %565 : vector<32x128xf32>
    %582 = arith.mulf %542, %566 : vector<32x128xf32>
    %583 = arith.subf %581, %582 : vector<32x128xf32>
    %584 = math.absf %583 : vector<32x128xf32>
    %585 = arith.addf %580, %584 : vector<32x128xf32>
    %586 = arith.mulf %520, %565 : vector<32x128xf32>
    %587 = arith.mulf %546, %566 : vector<32x128xf32>
    %588 = arith.subf %586, %587 : vector<32x128xf32>
    %589 = math.absf %588 : vector<32x128xf32>
    %590 = arith.addf %585, %589 : vector<32x128xf32>
    %cst_120 = arith.constant dense<0.000000e+00> : vector<128xf32>
    %591 = vector.multi_reduction <add>, %590, %cst_120 [0] : vector<32x128xf32> to vector<128xf32>
    %592 = vector.shape_cast %591 : vector<128xf32> to vector<1x128xf32>
    %cst_121 = arith.constant 4.000000e-01 : f32
    %593 = vector.broadcast %cst_121 : f32 to vector<1x128xf32>
    %594 = arith.mulf %593, %486 : vector<1x128xf32>
    %cst_122 = arith.constant 4.000000e-01 : f32
    %595 = vector.broadcast %cst_122 : f32 to vector<1x128xf32>
    %596 = arith.mulf %595, %494 : vector<1x128xf32>
    %597 = arith.addf %594, %596 : vector<1x128xf32>
    %cst_123 = arith.constant 2.000000e-01 : f32
    %598 = vector.broadcast %cst_123 : f32 to vector<1x128xf32>
    %599 = arith.mulf %598, %592 : vector<1x128xf32>
    %600 = arith.addf %597, %599 : vector<1x128xf32>
    %cst_124 = arith.constant 0.000000e+00 : f32
    %601 = vector.broadcast %cst_124 : f32 to vector<1x128xf32>
    %602 = arith.cmpf ogt, %18, %601 : vector<1x128xf32>
    %cst_125 = arith.constant 0.000000e+00 : f32
    %603 = vector.broadcast %cst_125 : f32 to vector<1x128xf32>
    %604 = arith.select %602, %600, %603 : vector<1x128xi1>, vector<1x128xf32>
    %c0_126 = arith.constant 0 : index
    %c0_127 = arith.constant 0 : index
    %605 = vector.load %arg5[%c0_126, %c0_127] : memref<1x128xf32, #tpu.memory_space<vmem>>, vector<1x128xf32>
    tpu.vector_store %arg5[%c0_126, %c0_127], %604 {strides = array<i32>} : memref<1x128xf32, #tpu.memory_space<vmem>>, vector<1x128xf32>,
    return
  }
  func.func @transform_0(%arg0: i32) -> (i32, i32, i32) {
    %c0_i32 = arith.constant 0 : i32
    %c0_i32_0 = arith.constant 0 : i32
    %c0_i32_1 = arith.constant 0 : i32
    return %c0_i32, %c0_i32_0, %arg0 : i32, i32, i32
  }
  func.func @transform_1(%arg0: i32) -> (i32, i32, i32) {
    %c0_i32 = arith.constant 0 : i32
    %c0_i32_0 = arith.constant 0 : i32
    %c0_i32_1 = arith.constant 0 : i32
    return %c0_i32, %c0_i32_0, %arg0 : i32, i32, i32
  }
  func.func @transform_2(%arg0: i32) -> (i32, i32, i32) {
    %c0_i32 = arith.constant 0 : i32
    %c0_i32_0 = arith.constant 0 : i32
    %c0_i32_1 = arith.constant 0 : i32
    return %c0_i32, %c0_i32_0, %arg0 : i32, i32, i32
  }
  func.func @transform_3(%arg0: i32) -> (i32, i32, i32) {
    %c0_i32 = arith.constant 0 : i32
    %c0_i32_0 = arith.constant 0 : i32
    %c0_i32_1 = arith.constant 0 : i32
    return %c0_i32, %c0_i32_0, %arg0 : i32, i32, i32
  }
  func.func @transform_4(%arg0: i32) -> (i32, i32) {
    %c0_i32 = arith.constant 0 : i32
    %c0_i32_0 = arith.constant 0 : i32
    return %c0_i32, %arg0 : i32, i32
  }
}

</mosaic_0001>

<llo_original>
// kernel: tpu_custom_call.1
$region0: #{tpu_custom_call.1}
  #allocation0 [shape = 'u32[]', space=smem, size = 0x4, offset = 0x4, fixed_abs, tag = 'smem constant byte address 0x4 - core index']
  #allocation1 [shape = 'u32[144,128]{1,0:T(1,128)}', space=vmem, size = 0x12000, scoped, tag = 'internal scratch']
  #allocation2 [shape = 'f32[64,128]{1,0:T(8,128)}', space=vmem, size = 0x8000, scoped, tag = 'scratch operand']
  %s0 = inlined_call_operand.hbm [shape: f32[4,8,128], index: 0, kind: input, shape index: {}]
  %s1 = inlined_call_operand.hbm [shape: f32[4,8,128], index: 1, kind: input, shape index: {}]
  %s2 = inlined_call_operand.hbm [shape: f32[8,32,128], index: 2, kind: input, shape index: {}]
  %s3 = inlined_call_operand.hbm [shape: f32[8,32,128], index: 3, kind: input, shape index: {}]
  %s4 = inlined_call_operand.hbm [shape: f32[1,128], index: 4, kind: output, shape index: {}]
  %s5 = sld [smem:[#allocation0]]
  $region42: #{tpu_custom_call.1} parent=0
    _
  %s7 = ssub.s32 1, %s5
  %s8 = scalar_select 0, %s7, %s5
  $region1: #{tpu_custom_call.1} parent=0
    #allocation3 [shape = 'u8[16384]{0}', space=vmem, size = 0x4000, scoped, tag = 'input window, operand 0, single buffered']
    #allocation4 [shape = 's32[1]{0}', space=sflag, size = 0x4, scoped, tag = 'scoped memory for tpu_custom_call.1']
    #allocation5 [shape = 's32[1]{0}', space=sflag, size = 0x4, scoped, tag = 'scoped memory for tpu_custom_call.1']
    #allocation6 [shape = 'u8[16384]{0}', space=vmem, size = 0x4000, scoped, tag = 'input window, operand 1, single buffered']
    #allocation7 [shape = 's32[1]{0}', space=sflag, size = 0x4, scoped, tag = 'scoped memory for tpu_custom_call.1']
    #allocation8 [shape = 'u8[131072]{0}', space=vmem, size = 0x20000, scoped, tag = 'input window, operand 2, single buffered']
    #allocation9 [shape = 'u8[131072]{0}', space=vmem, size = 0x20000, scoped, tag = 'input window, operand 3, single buffered']
    #allocation10 [shape = 's32[1]{0}', space=sflag, size = 0x4, scoped, tag = 'scoped memory for tpu_custom_call.1']
    #allocation11 [shape = 'u8[512]{0}', space=vmem, size = 0x400, scoped, tag = 'output window, operand 0, single buffered']
    %9 = vsyncpa [#allocation4], 0
    %10 = vsyncpa [#allocation7], 0
    %11 = vsyncpa [#allocation10], 0
    %12 = vsyncpa [#allocation5], 0
    // Predicated region
    $region2: #{tpu_custom_call.1} parent=1 // pred_check
      _
    $region3: #{tpu_custom_call.1} parent=1 // pred_check_branch
      %14 = sbr.rel (0) target = $region5
    $region4: #{tpu_custom_call.1} parent=1 // pred_region
      %s16 = ssub.s32 512, 512
      %17 = vsyncadd [#allocation4], %s16
      %s18 = sshll.u32 [#allocation3], 4
      %s19 = int_to_ptr.vmem [resolvable:$true] %s18
      %24 = dma.hbm_to_vmem [thread:$0]  %s0, 512, %s19, [#allocation4], 128, 128, 8
    $region5: #{tpu_custom_call.1} parent=1 // pred_fallthru
      _
    // Predicated region
    $region6: #{tpu_custom_call.1} parent=1 // pred_check
      _
    $region7: #{tpu_custom_call.1} parent=1 // pred_check_branch
      %26 = sbr.rel (0) target = $region9
    $region8: #{tpu_custom_call.1} parent=1 // pred_region
      %s28 = ssub.s32 512, 512
      %29 = vsyncadd [#allocation7], %s28
      %s30 = sshll.u32 [#allocation6], 4
      %s31 = int_to_ptr.vmem [resolvable:$true] %s30
      %36 = dma.hbm_to_vmem [thread:$0]  %s1, 512, %s31, [#allocation7], 128, 128, 8
    $region9: #{tpu_custom_call.1} parent=1 // pred_fallthru
      _
    // Predicated region
    $region10: #{tpu_custom_call.1} parent=1 // pred_check
      _
    $region11: #{tpu_custom_call.1} parent=1 // pred_check_branch
      %38 = sbr.rel (0) target = $region13
    $region12: #{tpu_custom_call.1} parent=1 // pred_region
      %s40 = ssub.s32 4096, 4096
      %41 = vsyncadd [#allocation7], %s40
      %s42 = sshll.u32 [#allocation8], 4
      %s43 = int_to_ptr.vmem [resolvable:$true] %s42
      %48 = dma.hbm_to_vmem [thread:$0]  %s2, 4096, %s43, [#allocation7], 128, 128, 8
    $region13: #{tpu_custom_call.1} parent=1 // pred_fallthru
      _
    // Predicated region
    $region14: #{tpu_custom_call.1} parent=1 // pred_check
      _
    $region15: #{tpu_custom_call.1} parent=1 // pred_check_branch
      %50 = sbr.rel (0) target = $region17
    $region16: #{tpu_custom_call.1} parent=1 // pred_region
      %s52 = ssub.s32 4096, 4096
      %53 = vsyncadd [#allocation10], %s52
      %s54 = sshll.u32 [#allocation9], 4
      %s55 = int_to_ptr.vmem [resolvable:$true] %s54
      %60 = dma.hbm_to_vmem [thread:$0]  %s3, 4096, %s55, [#allocation10], 128, 128, 8
    $region17: #{tpu_custom_call.1} parent=1 // pred_fallthru
      _
    // Predicated region
    $region18: #{tpu_custom_call.1} parent=1 // pred_check
      _
    $region19: #{tpu_custom_call.1} parent=1 // pred_check_branch
      %62 = sbr.rel (0) target = $region21
    $region20: #{tpu_custom_call.1} parent=1 // pred_region
      %63 = dma.done [#allocation4], 512
    $region21: #{tpu_custom_call.1} parent=1 // pred_fallthru
      _
    // Predicated region
    $region22: #{tpu_custom_call.1} parent=1 // pred_check
      _
    $region23: #{tpu_custom_call.1} parent=1 // pred_check_branch
      %65 = sbr.rel (0) target = $region25
    $region24: #{tpu_custom_call.1} parent=1 // pred_region
      %66 = dma.done [#allocation7], 512
    $region25: #{tpu_custom_call.1} parent=1 // pred_fallthru
      _
    // Predicated region
    $region26: #{tpu_custom_call.1} parent=1 // pred_check
      _
    $region27: #{tpu_custom_call.1} parent=1 // pred_check_branch
      %68 = sbr.rel (0) target = $region29
    $region28: #{tpu_custom_call.1} parent=1 // pred_region
      %69 = dma.done [#allocation7], 4096
    $region29: #{tpu_custom_call.1} parent=1 // pred_fallthru
      _
    // Predicated region
    $region30: #{tpu_custom_call.1} parent=1 // pred_check
      _
    $region31: #{tpu_custom_call.1} parent=1 // pred_check_branch
      %71 = sbr.rel (0) target = $region33
    $region32: #{tpu_custom_call.1} parent=1 // pred_region
      %72 = dma.done [#allocation10], 4096
    $region33: #{tpu_custom_call.1} parent=1 // pred_fallthru
      _
    %v73 = vld [vmem:[#allocation3] sm:$0xff]
    %v74 = vld [vmem:[#allocation3 + $0x8] sm:$0xff]
    %v75 = vld [vmem:[#allocation3 + $0x10] sm:$0xff]
    %v76 = vld [vmem:[#allocation3 + $0x18] sm:$0xff]
    %v77 = vld [vmem:[#allocation6] sm:$0xff]
    %v78 = vld [vmem:[#allocation6 + $0x8] sm:$0xff]
    %v79 = vld [vmem:[#allocation6 + $0x10] sm:$0xff]
    %v80 = vld [vmem:[#allocation6 + $0x18] sm:$0xff]
    %v81 = vld [vmem:[#allocation8] sm:$0xff]
    %v82 = vld [vmem:[#allocation8 + $0x8] sm:$0xff]
    %v83 = vld [vmem:[#allocation8 + $0x10] sm:$0xff]
    %v84 = vld [vmem:[#allocation8 + $0x18] sm:$0xff]
    %v85 = vld [vmem:[#allocation8 + $0x20] sm:$0xff]
    %v86 = vld [vmem:[#allocation8 + $0x28] sm:$0xff]
    %v87 = vld [vmem:[#allocation8 + $0x30] sm:$0xff]
    %v88 = vld [vmem:[#allocation8 + $0x38] sm:$0xff]
    %v89 = vld [vmem:[#allocation8 + $0x40] sm:$0xff]
    %v90 = vld [vmem:[#allocation8 + $0x48] sm:$0xff]
    %v91 = vld [vmem:[#allocation8 + $0x50] sm:$0xff]
    %v92 = vld [vmem:[#allocation8 + $0x58] sm:$0xff]
    %v93 = vld [vmem:[#allocation8 + $0x60] sm:$0xff]
    %v94 = vld [vmem:[#allocation8 + $0x68] sm:$0xff]
    %v95 = vld [vmem:[#allocation8 + $0x70] sm:$0xff]
    %v96 = vld [vmem:[#allocation8 + $0x78] sm:$0xff]
    %v97 = vld [vmem:[#allocation8 + $0x80] sm:$0xff]
    %v98 = vld [vmem:[#allocation8 + $0x88] sm:$0xff]
    %v99 = vld [vmem:[#allocation8 + $0x90] sm:$0xff]
    %v100 = vld [vmem:[#allocation8 + $0x98] sm:$0xff]
    %v101 = vld [vmem:[#allocation8 + $0xa0] sm:$0xff]
    %v102 = vld [vmem:[#allocation8 + $0xa8] sm:$0xff]
    %v103 = vld [vmem:[#allocation8 + $0xb0] sm:$0xff]
    %v104 = vld [vmem:[#allocation8 + $0xb8] sm:$0xff]
    %v105 = vld [vmem:[#allocation8 + $0xc0] sm:$0xff]
    %v106 = vld [vmem:[#allocation8 + $0xc8] sm:$0xff]
    %v107 = vld [vmem:[#allocation8 + $0xd0] sm:$0xff]
    %v108 = vld [vmem:[#allocation8 + $0xd8] sm:$0xff]
    %v109 = vld [vmem:[#allocation8 + $0xe0] sm:$0xff]
    %v110 = vld [vmem:[#allocation8 + $0xe8] sm:$0xff]
    %v111 = vld [vmem:[#allocation8 + $0xf0] sm:$0xff]
    %v112 = vld [vmem:[#allocation8 + $0xf8] sm:$0xff]
    %v113 = vld [vmem:[#allocation9] sm:$0xff]
    %v114 = vld [vmem:[#allocation9 + $0x8] sm:$0xff]
    %v115 = vld [vmem:[#allocation9 + $0x10] sm:$0xff]
    %v116 = vld [vmem:[#allocation9 + $0x18] sm:$0xff]
    %v117 = vld [vmem:[#allocation9 + $0x20] sm:$0xff]
    %v118 = vld [vmem:[#allocation9 + $0x28] sm:$0xff]
    %v119 = vld [vmem:[#allocation9 + $0x30] sm:$0xff]
    %v120 = vld [vmem:[#allocation9 + $0x38] sm:$0xff]
    %v121 = vld [vmem:[#allocation9 + $0x40] sm:$0xff]
    %v122 = vld [vmem:[#allocation9 + $0x48] sm:$0xff]
    %v123 = vld [vmem:[#allocation9 + $0x50] sm:$0xff]
    %v124 = vld [vmem:[#allocation9 + $0x58] sm:$0xff]
    %v125 = vld [vmem:[#allocation9 + $0x60] sm:$0xff]
    %v126 = vld [vmem:[#allocation9 + $0x68] sm:$0xff]
    %v127 = vld [vmem:[#allocation9 + $0x70] sm:$0xff]
    %v128 = vld [vmem:[#allocation9 + $0x78] sm:$0xff]
    %v129 = vld [vmem:[#allocation9 + $0x80] sm:$0xff]
    %v130 = vld [vmem:[#allocation9 + $0x88] sm:$0xff]
    %v131 = vld [vmem:[#allocation9 + $0x90] sm:$0xff]
    %v132 = vld [vmem:[#allocation9 + $0x98] sm:$0xff]
    %v133 = vld [vmem:[#allocation9 + $0xa0] sm:$0xff]
    %v134 = vld [vmem:[#allocation9 + $0xa8] sm:$0xff]
    %v135 = vld [vmem:[#allocation9 + $0xb0] sm:$0xff]
    %v136 = vld [vmem:[#allocation9 + $0xb8] sm:$0xff]
    %v137 = vld [vmem:[#allocation9 + $0xc0] sm:$0xff]
    %v138 = vld [vmem:[#allocation9 + $0xc8] sm:$0xff]
    %v139 = vld [vmem:[#allocation9 + $0xd0] sm:$0xff]
    %v140 = vld [vmem:[#allocation9 + $0xd8] sm:$0xff]
    %v141 = vld [vmem:[#allocation9 + $0xe0] sm:$0xff]
    %v142 = vld [vmem:[#allocation9 + $0xe8] sm:$0xff]
    %v143 = vld [vmem:[#allocation9 + $0xf0] sm:$0xff]
    %v144 = vld [vmem:[#allocation9 + $0xf8] sm:$0xff]
    %vm145 = vcmp.ne.f32.partialorder %v73, %v77
    %vm146 = vcmp.ne.f32.partialorder %v74, %v78
    %vm147 = vcmp.ne.f32.partialorder %v75, %v79
    %vm148 = vcmp.ne.f32.partialorder %v76, %v80
    %v149 = vsel %vm145, 1.0, 0.0
    %v150 = vsel %vm146, 1.0, 0.0
    %v151 = vsel %vm147, 1.0, 0.0
    %v152 = vsel %vm148, 1.0, 0.0
    %v153 = vmax.f32 %v149, %v150
    %v154 = vmax.f32 %v151, %v152
    %v155 = vmax.f32 %v153, %v154
    %v156 = vrot.slane %v155, 4
    %v157 = vmax.f32 %v155, %v156
    %v158 = vrot.slane %v157, 2
    %v159 = vmax.f32 %v157, %v158
    %v160 = vrot.slane %v159, 1
    %v161 = vmax.f32 %v159, %v160
    %vm162 = vcmp.ne.f32.partialorder %v81, %v113
    %vm163 = vcmp.ne.f32.partialorder %v82, %v114
    %vm164 = vcmp.ne.f32.partialorder %v83, %v115
    %vm165 = vcmp.ne.f32.partialorder %v84, %v116
    %vm166 = vcmp.ne.f32.partialorder %v85, %v117
    %vm167 = vcmp.ne.f32.partialorder %v86, %v118
    %vm168 = vcmp.ne.f32.partialorder %v87, %v119
    %vm169 = vcmp.ne.f32.partialorder %v88, %v120
    %vm170 = vcmp.ne.f32.partialorder %v89, %v121
    %vm171 = vcmp.ne.f32.partialorder %v90, %v122
    %vm172 = vcmp.ne.f32.partialorder %v91, %v123
    %vm173 = vcmp.ne.f32.partialorder %v92, %v124
    %vm174 = vcmp.ne.f32.partialorder %v93, %v125
    %vm175 = vcmp.ne.f32.partialorder %v94, %v126
    %vm176 = vcmp.ne.f32.partialorder %v95, %v127
    %vm177 = vcmp.ne.f32.partialorder %v96, %v128
    %vm178 = vcmp.ne.f32.partialorder %v97, %v129
    %vm179 = vcmp.ne.f32.partialorder %v98, %v130
    %vm180 = vcmp.ne.f32.partialorder %v99, %v131
    %vm181 = vcmp.ne.f32.partialorder %v100, %v132
    %vm182 = vcmp.ne.f32.partialorder %v101, %v133
    %vm183 = vcmp.ne.f32.partialorder %v102, %v134
    %vm184 = vcmp.ne.f32.partialorder %v103, %v135
    %vm185 = vcmp.ne.f32.partialorder %v104, %v136
    %vm186 = vcmp.ne.f32.partialorder %v105, %v137
    %vm187 = vcmp.ne.f32.partialorder %v106, %v138
    %vm188 = vcmp.ne.f32.partialorder %v107, %v139
    %vm189 = vcmp.ne.f32.partialorder %v108, %v140
    %vm190 = vcmp.ne.f32.partialorder %v109, %v141
    %vm191 = vcmp.ne.f32.partialorder %v110, %v142
    %vm192 = vcmp.ne.f32.partialorder %v111, %v143
    %vm193 = vcmp.ne.f32.partialorder %v112, %v144
    %v194 = vsel %vm162, 1.0, 0.0
    %v195 = vsel %vm163, 1.0, 0.0
    %v196 = vsel %vm164, 1.0, 0.0
    %v197 = vsel %vm165, 1.0, 0.0
    %v198 = vsel %vm166, 1.0, 0.0
    %v199 = vsel %vm167, 1.0, 0.0
    %v200 = vsel %vm168, 1.0, 0.0
    %v201 = vsel %vm169, 1.0, 0.0
    %v202 = vsel %vm170, 1.0, 0.0
    %v203 = vsel %vm171, 1.0, 0.0
    %v204 = vsel %vm172, 1.0, 0.0
    %v205 = vsel %vm173, 1.0, 0.0
    %v206 = vsel %vm174, 1.0, 0.0
    %v207 = vsel %vm175, 1.0, 0.0
    %v208 = vsel %vm176, 1.0, 0.0
    %v209 = vsel %vm177, 1.0, 0.0
    %v210 = vsel %vm178, 1.0, 0.0
    %v211 = vsel %vm179, 1.0, 0.0
    %v212 = vsel %vm180, 1.0, 0.0
    %v213 = vsel %vm181, 1.0, 0.0
    %v214 = vsel %vm182, 1.0, 0.0
    %v215 = vsel %vm183, 1.0, 0.0
    %v216 = vsel %vm184, 1.0, 0.0
    %v217 = vsel %vm185, 1.0, 0.0
    %v218 = vsel %vm186, 1.0, 0.0
    %v219 = vsel %vm187, 1.0, 0.0
    %v220 = vsel %vm188, 1.0, 0.0
    %v221 = vsel %vm189, 1.0, 0.0
    %v222 = vsel %vm190, 1.0, 0.0
    %v223 = vsel %vm191, 1.0, 0.0
    %v224 = vsel %vm192, 1.0, 0.0
    %v225 = vsel %vm193, 1.0, 0.0
    %v226 = vmax.f32 %v194, %v198
    %v227 = vmax.f32 %v226, %v202
    %v228 = vmax.f32 %v227, %v206
    %v229 = vmax.f32 %v228, %v210
    %v230 = vmax.f32 %v229, %v214
    %v231 = vmax.f32 %v230, %v218
    %v232 = vmax.f32 %v231, %v222
    %v233 = vmax.f32 %v195, %v199
    %v234 = vmax.f32 %v233, %v203
    %v235 = vmax.f32 %v234, %v207
    %v236 = vmax.f32 %v235, %v211
    %v237 = vmax.f32 %v236, %v215
    %v238 = vmax.f32 %v237, %v219
    %v239 = vmax.f32 %v238, %v223
    %v240 = vmax.f32 %v196, %v200
    %v241 = vmax.f32 %v240, %v204
    %v242 = vmax.f32 %v241, %v208
    %v243 = vmax.f32 %v242, %v212
    %v244 = vmax.f32 %v243, %v216
    %v245 = vmax.f32 %v244, %v220
    %v246 = vmax.f32 %v245, %v224
    %v247 = vmax.f32 %v197, %v201
    %v248 = vmax.f32 %v247, %v205
    %v249 = vmax.f32 %v248, %v209
    %v250 = vmax.f32 %v249, %v213
    %v251 = vmax.f32 %v250, %v217
    %v252 = vmax.f32 %v251, %v221
    %v253 = vmax.f32 %v252, %v225
    %v254 = vmax.f32 %v232, %v239
    %v255 = vmax.f32 %v246, %v253
    %v256 = vmax.f32 %v254, %v255
    %v257 = vrot.slane %v256, 4
    %v258 = vmax.f32 %v256, %v257
    %v259 = vrot.slane %v258, 2
    %v260 = vmax.f32 %v258, %v259
    %v261 = vrot.slane %v260, 1
    %v262 = vmax.f32 %v260, %v261
    %v263 = vmax.f32 %v161, %v262
    %v264 = vmul.f32 %v73, %v73
    %v265 = vmul.f32 %v77, %v77
    %v266 = vmul.f32 %v74, %v74
    %v267 = vadd.f32 %v264, %v266
    %v268 = vmul.f32 %v78, %v78
    %v269 = vadd.f32 %v265, %v268
    %v270 = vmul.f32 %v75, %v75
    %v271 = vadd.f32 %v267, %v270
    %v272 = vmul.f32 %v79, %v79
    %v273 = vadd.f32 %v269, %v272
    %v274 = vmul.f32 %v76, %v76
    %v275 = vadd.f32 %v271, %v274
    %v276 = vmul.f32 %v80, %v80
    %v277 = vadd.f32 %v273, %v276
    %v278 = vrsqrt.pop %v275
    %v279 = vmul.f32 %v275, %v278
    %vm280 = vcmp.eq.f32.partialorder %v275, inf
    %v281 = vsel %vm280, %v275, %v279
    %vm282 = vcmp.eq.f32.partialorder %v275, 0.0
    %v283 = vand.u32 %v275, 2147483648
    %v284 = vsel %vm282, %v283, %v281
    %v285 = vadd.f32 %v284, 1e-08
    %v286 = vrcp.pop %v285
    %v287 = vrsqrt.pop %v277
    %v288 = vmul.f32 %v277, %v287
    %vm289 = vcmp.eq.f32.partialorder %v277, inf
    %v290 = vsel %vm289, %v277, %v288
    %vm291 = vcmp.eq.f32.partialorder %v277, 0.0
    %v292 = vand.u32 %v277, 2147483648
    %v293 = vsel %vm291, %v292, %v290
    %v294 = vadd.f32 %v293, 1e-08
    %v295 = vrcp.pop %v294
    %v296 = vmul.f32 %v73, %v286
    %v297 = vmul.f32 %v74, %v286
    %v298 = vmul.f32 %v75, %v286
    %v299 = vmul.f32 %v76, %v286
    %v300 = vmul.f32 %v77, %v295
    %v301 = vmul.f32 %v78, %v295
    %v302 = vmul.f32 %v79, %v295
    %v303 = vmul.f32 %v80, %v295
    %v304 = vlaneseq
    %v305 = vshrl.u32 %v304, 7
    %v306 = vsub.s32 0, %v305
    %v307 = vrot.slane %v296, %v306
    %v308 = vsub.f32 %v307, %v300
    %v309 = vmul.f32 %v308, %v308
    %v310 = vlaneseq
    %v311 = vshrl.u32 %v310, 7
    %v312 = vsub.s32 0, %v311
    %v313 = vrot.slane %v297, %v312
    %v314 = vsub.f32 %v313, %v301
    %v315 = vmul.f32 %v314, %v314
    %v316 = vadd.f32 %v309, %v315
    %v317 = vlaneseq
    %v318 = vshrl.u32 %v317, 7
    %v319 = vsub.s32 0, %v318
    %v320 = vrot.slane %v298, %v319
    %v321 = vsub.f32 %v320, %v302
    %v322 = vmul.f32 %v321, %v321
    %v323 = vadd.f32 %v316, %v322
    %v324 = vlaneseq
    %v325 = vshrl.u32 %v324, 7
    %v326 = vsub.s32 0, %v325
    %v327 = vrot.slane %v299, %v326
    %v328 = vsub.f32 %v327, %v303
    %v329 = vmul.f32 %v328, %v328
    %v330 = vadd.f32 %v323, %v329
    %v331 = vrsqrt.pop %v330
    %v332 = vmul.f32 %v330, %v331
    %vm333 = vcmp.eq.f32.partialorder %v330, inf
    %v334 = vsel %vm333, %v330, %v332
    %vm335 = vcmp.eq.f32.partialorder %v330, 0.0
    %v336 = vand.u32 %v330, 2147483648
    %v337 = vsel %vm335, %v336, %v334
    %v338 = vlaneseq
    %v339 = vshrl.u32 %v338, 7
    %v340 = vsub.s32 1, %v339
    %v341 = vrot.slane %v296, %v340
    %v342 = vsub.f32 %v341, %v300
    %v343 = vmul.f32 %v342, %v342
    %v344 = vlaneseq
    %v345 = vshrl.u32 %v344, 7
    %v346 = vsub.s32 1, %v345
    %v347 = vrot.slane %v297, %v346
    %v348 = vsub.f32 %v347, %v301
    %v349 = vmul.f32 %v348, %v348
    %v350 = vadd.f32 %v343, %v349
    %v351 = vlaneseq
    %v352 = vshrl.u32 %v351, 7
    %v353 = vsub.s32 1, %v352
    %v354 = vrot.slane %v298, %v353
    %v355 = vsub.f32 %v354, %v302
    %v356 = vmul.f32 %v355, %v355
    %v357 = vadd.f32 %v350, %v356
    %v358 = vlaneseq
    %v359 = vshrl.u32 %v358, 7
    %v360 = vsub.s32 1, %v359
    %v361 = vrot.slane %v299, %v360
    %v362 = vsub.f32 %v361, %v303
    %v363 = vmul.f32 %v362, %v362
    %v364 = vadd.f32 %v357, %v363
    %v365 = vrsqrt.pop %v364
    %v366 = vmul.f32 %v364, %v365
    %vm367 = vcmp.eq.f32.partialorder %v364, inf
    %v368 = vsel %vm367, %v364, %v366
    %vm369 = vcmp.eq.f32.partialorder %v364, 0.0
    %v370 = vand.u32 %v364, 2147483648
    %v371 = vsel %vm369, %v370, %v368
    %v372 = vlaneseq
    %v373 = vshrl.u32 %v372, 7
    %v374 = vsub.s32 2, %v373
    %v375 = vrot.slane %v296, %v374
    %v376 = vsub.f32 %v375, %v300
    %v377 = vmul.f32 %v376, %v376
    %v378 = vlaneseq
    %v379 = vshrl.u32 %v378, 7
    %v380 = vsub.s32 2, %v379
    %v381 = vrot.slane %v297, %v380
    %v382 = vsub.f32 %v381, %v301
    %v383 = vmul.f32 %v382, %v382
    %v384 = vadd.f32 %v377, %v383
    %v385 = vlaneseq
    %v386 = vshrl.u32 %v385, 7
    %v387 = vsub.s32 2, %v386
    %v388 = vrot.slane %v298, %v387
    %v389 = vsub.f32 %v388, %v302
    %v390 = vmul.f32 %v389, %v389
    %v391 = vadd.f32 %v384, %v390
    %v392 = vlaneseq
    %v393 = vshrl.u32 %v392, 7
    %v394 = vsub.s32 2, %v393
    %v395 = vrot.slane %v299, %v394
    %v396 = vsub.f32 %v395, %v303
    %v397 = vmul.f32 %v396, %v396
    %v398 = vadd.f32 %v391, %v397
    %v399 = vrsqrt.pop %v398
    %v400 = vmul.f32 %v398, %v399
    %vm401 = vcmp.eq.f32.partialorder %v398, inf
    %v402 = vsel %vm401, %v398, %v400
    %vm403 = vcmp.eq.f32.partialorder %v398, 0.0
    %v404 = vand.u32 %v398, 2147483648
    %v405 = vsel %vm403, %v404, %v402
    %v406 = vlaneseq
    %v407 = vshrl.u32 %v406, 7
    %v408 = vsub.s32 3, %v407
    %v409 = vrot.slane %v296, %v408
    %v410 = vsub.f32 %v409, %v300
    %v411 = vmul.f32 %v410, %v410
    %v412 = vlaneseq
    %v413 = vshrl.u32 %v412, 7
    %v414 = vsub.s32 3, %v413
    %v415 = vrot.slane %v297, %v414
    %v416 = vsub.f32 %v415, %v301
    %v417 = vmul.f32 %v416, %v416
    %v418 = vadd.f32 %v411, %v417
    %v419 = vlaneseq
    %v420 = vshrl.u32 %v419, 7
    %v421 = vsub.s32 3, %v420
    %v422 = vrot.slane %v298, %v421
    %v423 = vsub.f32 %v422, %v302
    %v424 = vmul.f32 %v423, %v423
    %v425 = vadd.f32 %v418, %v424
    %v426 = vlaneseq
    %v427 = vshrl.u32 %v426, 7
    %v428 = vsub.s32 3, %v427
    %v429 = vrot.slane %v299, %v428
    %v430 = vsub.f32 %v429, %v303
    %v431 = vmul.f32 %v430, %v430
    %v432 = vadd.f32 %v425, %v431
    %v433 = vrsqrt.pop %v432
    %v434 = vmul.f32 %v432, %v433
    %vm435 = vcmp.eq.f32.partialorder %v432, inf
    %v436 = vsel %vm435, %v432, %v434
    %vm437 = vcmp.eq.f32.partialorder %v432, 0.0
    %v438 = vand.u32 %v432, 2147483648
    %v439 = vsel %vm437, %v438, %v436
    %v440 = vlaneseq
    %v441 = vshrl.u32 %v440, 7
    %v442 = vsub.s32 4, %v441
    %v443 = vrot.slane %v296, %v442
    %v444 = vsub.f32 %v443, %v300
    %v445 = vmul.f32 %v444, %v444
    %v446 = vlaneseq
    %v447 = vshrl.u32 %v446, 7
    %v448 = vsub.s32 4, %v447
    %v449 = vrot.slane %v297, %v448
    %v450 = vsub.f32 %v449, %v301
    %v451 = vmul.f32 %v450, %v450
    %v452 = vadd.f32 %v445, %v451
    %v453 = vlaneseq
    %v454 = vshrl.u32 %v453, 7
    %v455 = vsub.s32 4, %v454
    %v456 = vrot.slane %v298, %v455
    %v457 = vsub.f32 %v456, %v302
    %v458 = vmul.f32 %v457, %v457
    %v459 = vadd.f32 %v452, %v458
    %v460 = vlaneseq
    %v461 = vshrl.u32 %v460, 7
    %v462 = vsub.s32 4, %v461
    %v463 = vrot.slane %v299, %v462
    %v464 = vsub.f32 %v463, %v303
    %v465 = vmul.f32 %v464, %v464
    %v466 = vadd.f32 %v459, %v465
    %v467 = vrsqrt.pop %v466
    %v468 = vmul.f32 %v466, %v467
    %vm469 = vcmp.eq.f32.partialorder %v466, inf
    %v470 = vsel %vm469, %v466, %v468
    %vm471 = vcmp.eq.f32.partialorder %v466, 0.0
    %v472 = vand.u32 %v466, 2147483648
    %v473 = vsel %vm471, %v472, %v470
    %v474 = vlaneseq
    %v475 = vshrl.u32 %v474, 7
    %v476 = vsub.s32 5, %v475
    %v477 = vrot.slane %v296, %v476
    %v478 = vsub.f32 %v477, %v300
    %v479 = vmul.f32 %v478, %v478
    %v480 = vlaneseq
    %v481 = vshrl.u32 %v480, 7
    %v482 = vsub.s32 5, %v481
    %v483 = vrot.slane %v297, %v482
    %v484 = vsub.f32 %v483, %v301
    %v485 = vmul.f32 %v484, %v484
    %v486 = vadd.f32 %v479, %v485
    %v487 = vlaneseq
    %v488 = vshrl.u32 %v487, 7
    %v489 = vsub.s32 5, %v488
    %v490 = vrot.slane %v298, %v489
    %v491 = vsub.f32 %v490, %v302
    %v492 = vmul.f32 %v491, %v491
    %v493 = vadd.f32 %v486, %v492
    %v494 = vlaneseq
    %v495 = vshrl.u32 %v494, 7
    %v496 = vsub.s32 5, %v495
    %v497 = vrot.slane %v299, %v496
    %v498 = vsub.f32 %v497, %v303
    %v499 = vmul.f32 %v498, %v498
    %v500 = vadd.f32 %v493, %v499
    %v501 = vrsqrt.pop %v500
    %v502 = vmul.f32 %v500, %v501
    %vm503 = vcmp.eq.f32.partialorder %v500, inf
    %v504 = vsel %vm503, %v500, %v502
    %vm505 = vcmp.eq.f32.partialorder %v500, 0.0
    %v506 = vand.u32 %v500, 2147483648
    %v507 = vsel %vm505, %v506, %v504
    %v508 = vlaneseq
    %v509 = vshrl.u32 %v508, 7
    %v510 = vsub.s32 6, %v509
    %v511 = vrot.slane %v296, %v510
    %v512 = vsub.f32 %v511, %v300
    %v513 = vmul.f32 %v512, %v512
    %v514 = vlaneseq
    %v515 = vshrl.u32 %v514, 7
    %v516 = vsub.s32 6, %v515
    %v517 = vrot.slane %v297, %v516
    %v518 = vsub.f32 %v517, %v301
    %v519 = vmul.f32 %v518, %v518
    %v520 = vadd.f32 %v513, %v519
    %v521 = vlaneseq
    %v522 = vshrl.u32 %v521, 7
    %v523 = vsub.s32 6, %v522
    %v524 = vrot.slane %v298, %v523
    %v525 = vsub.f32 %v524, %v302
    %v526 = vmul.f32 %v525, %v525
    %v527 = vadd.f32 %v520, %v526
    %v528 = vlaneseq
    %v529 = vshrl.u32 %v528, 7
    %v530 = vsub.s32 6, %v529
    %v531 = vrot.slane %v299, %v530
    %v532 = vsub.f32 %v531, %v303
    %v533 = vmul.f32 %v532, %v532
    %v534 = vadd.f32 %v527, %v533
    %v535 = vrsqrt.pop %v534
    %v536 = vmul.f32 %v534, %v535
    %vm537 = vcmp.eq.f32.partialorder %v534, inf
    %v538 = vsel %vm537, %v534, %v536
    %vm539 = vcmp.eq.f32.partialorder %v534, 0.0
    %v540 = vand.u32 %v534, 2147483648
    %v541 = vsel %vm539, %v540, %v538
    %v542 = vlaneseq
    %v543 = vshrl.u32 %v542, 7
    %v544 = vsub.s32 7, %v543
    %v545 = vrot.slane %v296, %v544
    %v546 = vsub.f32 %v545, %v300
    %v547 = vmul.f32 %v546, %v546
    %v548 = vlaneseq
    %v549 = vshrl.u32 %v548, 7
    %v550 = vsub.s32 7, %v549
    %v551 = vrot.slane %v297, %v550
    %v552 = vsub.f32 %v551, %v301
    %v553 = vmul.f32 %v552, %v552
    %v554 = vadd.f32 %v547, %v553
    %v555 = vlaneseq
    %v556 = vshrl.u32 %v555, 7
    %v557 = vsub.s32 7, %v556
    %v558 = vrot.slane %v298, %v557
    %v559 = vsub.f32 %v558, %v302
    %v560 = vmul.f32 %v559, %v559
    %v561 = vadd.f32 %v554, %v560
    %v562 = vlaneseq
    %v563 = vshrl.u32 %v562, 7
    %v564 = vsub.s32 7, %v563
    %v565 = vrot.slane %v299, %v564
    %v566 = vsub.f32 %v565, %v303
    %v567 = vmul.f32 %v566, %v566
    %v568 = vadd.f32 %v561, %v567
    %v569 = vrsqrt.pop %v568
    %v570 = vmul.f32 %v568, %v569
    %vm571 = vcmp.eq.f32.partialorder %v568, inf
    %v572 = vsel %vm571, %v568, %v570
    %vm573 = vcmp.eq.f32.partialorder %v568, 0.0
    %v574 = vand.u32 %v568, 2147483648
    %v575 = vsel %vm573, %v574, %v572
    %v576 = vmax.f32 %v337, %v371
    %v577 = vmax.f32 %v576, %v405
    %v578 = vmax.f32 %v577, %v439
    %v579 = vmax.f32 %v578, %v473
    %v580 = vmax.f32 %v579, %v507
    %v581 = vmax.f32 %v580, %v541
    %v582 = vmax.f32 %v581, %v575
    %v583 = vrot.slane %v582, 4
    %v584 = vmax.f32 %v582, %v583
    %v585 = vrot.slane %v584, 2
    %v586 = vmax.f32 %v584, %v585
    %v587 = vrot.slane %v586, 1
    %v588 = vmax.f32 %v586, %v587
    %v589 = vadd.f32 %v588, 1e-08
    %v590 = vrcp.pop %v589
    %v591 = vmul.f32 %v337, %v590
    %592 = vst [vmem:[#allocation2] sm:$0xff] %v591
    %v593 = vmul.f32 %v371, %v590
    %594 = vst [vmem:[#allocation2 + $0x8] sm:$0xff] %v593
    %v595 = vmul.f32 %v405, %v590
    %596 = vst [vmem:[#allocation2 + $0x10] sm:$0xff] %v595
    %v597 = vmul.f32 %v439, %v590
    %598 = vst [vmem:[#allocation2 + $0x18] sm:$0xff] %v597
    %v599 = vmul.f32 %v473, %v590
    %600 = vst [vmem:[#allocation2 + $0x20] sm:$0xff] %v599
    %v601 = vmul.f32 %v507, %v590
    %602 = vst [vmem:[#allocation2 + $0x28] sm:$0xff] %v601
    %v603 = vmul.f32 %v541, %v590
    %604 = vst [vmem:[#allocation2 + $0x30] sm:$0xff] %v603
    %v605 = vmul.f32 %v575, %v590
    %606 = vst [vmem:[#allocation2 + $0x38] sm:$0xff] %v605
    %v607 = vld [vmem:[#allocation2] sm:$0x1]
    %v608 = vld [vmem:[#allocation2 + $0x1] sm:$0x1]
    %v609 = vadd.f32 %v607, %v608
    %v610 = vld [vmem:[#allocation2 + $0x2] sm:$0x1]
    %v611 = vadd.f32 %v609, %v610
    %v612 = vld [vmem:[#allocation2 + $0x3] sm:$0x1]
    %v613 = vadd.f32 %v611, %v612
    %v614 = vld [vmem:[#allocation2 + $0x4] sm:$0x1]
    %v615 = vadd.f32 %v613, %v614
    %v616 = vld [vmem:[#allocation2 + $0x5] sm:$0x1]
    %v617 = vadd.f32 %v615, %v616
    %v618 = vld [vmem:[#allocation2 + $0x6] sm:$0x1]
    %v619 = vadd.f32 %v617, %v618
    %v620 = vld [vmem:[#allocation2 + $0x7] sm:$0x1]
    %v621 = vadd.f32 %v619, %v620
    %v622 = vld [vmem:[#allocation2 + $0x8] sm:$0x1]
    %v623 = vadd.f32 %v607, %v622
    %v624 = vmin.f32 %v609, %v623
    %v625 = vmin.f32 %v624, %v607
    %v626 = vld [vmem:[#allocation2 + $0x9] sm:$0x1]
    %v627 = vadd.f32 %v626, %v625
    %v628 = vmin.f32 %v611, %v627
    %v629 = vmin.f32 %v628, %v609
    %v630 = vld [vmem:[#allocation2 + $0xa] sm:$0x1]
    %v631 = vadd.f32 %v630, %v629
    %v632 = vmin.f32 %v613, %v631
    %v633 = vmin.f32 %v632, %v611
    %v634 = vld [vmem:[#allocation2 + $0xb] sm:$0x1]
    %v635 = vadd.f32 %v634, %v633
    %v636 = vmin.f32 %v615, %v635
    %v637 = vmin.f32 %v636, %v613
    %v638 = vld [vmem:[#allocation2 + $0xc] sm:$0x1]
    %v639 = vadd.f32 %v638, %v637
    %v640 = vmin.f32 %v617, %v639
    %v641 = vmin.f32 %v640, %v615
    %v642 = vld [vmem:[#allocation2 + $0xd] sm:$0x1]
    %v643 = vadd.f32 %v642, %v641
    %v644 = vmin.f32 %v619, %v643
    %v645 = vmin.f32 %v644, %v617
    %v646 = vld [vmem:[#allocation2 + $0xe] sm:$0x1]
    %v647 = vadd.f32 %v646, %v645
    %v648 = vmin.f32 %v621, %v647
    %v649 = vmin.f32 %v648, %v619
    %v650 = vld [vmem:[#allocation2 + $0xf] sm:$0x1]
    %v651 = vadd.f32 %v650, %v649
    %v652 = vld [vmem:[#allocation2 + $0x10] sm:$0x1]
    %v653 = vadd.f32 %v623, %v652
    %v654 = vmin.f32 %v627, %v653
    %v655 = vmin.f32 %v654, %v623
    %v656 = vld [vmem:[#allocation2 + $0x11] sm:$0x1]
    %v657 = vadd.f32 %v656, %v655
    %v658 = vmin.f32 %v631, %v657
    %v659 = vmin.f32 %v658, %v627
    %v660 = vld [vmem:[#allocation2 + $0x12] sm:$0x1]
    %v661 = vadd.f32 %v660, %v659
    %v662 = vmin.f32 %v635, %v661
    %v663 = vmin.f32 %v662, %v631
    %v664 = vld [vmem:[#allocation2 + $0x13] sm:$0x1]
    %v665 = vadd.f32 %v664, %v663
    %v666 = vmin.f32 %v639, %v665
    %v667 = vmin.f32 %v666, %v635
    %v668 = vld [vmem:[#allocation2 + $0x14] sm:$0x1]
    %v669 = vadd.f32 %v668, %v667
    %v670 = vmin.f32 %v643, %v669
    %v671 = vmin.f32 %v670, %v639
    %v672 = vld [vmem:[#allocation2 + $0x15] sm:$0x1]
    %v673 = vadd.f32 %v672, %v671
    %v674 = vmin.f32 %v647, %v673
    %v675 = vmin.f32 %v674, %v643
    %v676 = vld [vmem:[#allocation2 + $0x16] sm:$0x1]
    %v677 = vadd.f32 %v676, %v675
    %v678 = vmin.f32 %v651, %v677
    %v679 = vmin.f32 %v678, %v647
    %v680 = vld [vmem:[#allocation2 + $0x17] sm:$0x1]
    %v681 = vadd.f32 %v680, %v679
    %v682 = vld [vmem:[#allocation2 + $0x18] sm:$0x1]
    %v683 = vadd.f32 %v653, %v682
    %v684 = vmin.f32 %v657, %v683
    %v685 = vmin.f32 %v684, %v653
    %v686 = vld [vmem:[#allocation2 + $0x19] sm:$0x1]
    %v687 = vadd.f32 %v686, %v685
    %v688 = vmin.f32 %v661, %v687
    %v689 = vmin.f32 %v688, %v657
    %v690 = vld [vmem:[#allocation2 + $0x1a] sm:$0x1]
    %v691 = vadd.f32 %v690, %v689
    %v692 = vmin.f32 %v665, %v691
    %v693 = vmin.f32 %v692, %v661
    %v694 = vld [vmem:[#allocation2 + $0x1b] sm:$0x1]
    %v695 = vadd.f32 %v694, %v693
    %v696 = vmin.f32 %v669, %v695
    %v697 = vmin.f32 %v696, %v665
    %v698 = vld [vmem:[#allocation2 + $0x1c] sm:$0x1]
    %v699 = vadd.f32 %v698, %v697
    %v700 = vmin.f32 %v673, %v699
    %v701 = vmin.f32 %v700, %v669
    %v702 = vld [vmem:[#allocation2 + $0x1d] sm:$0x1]
    %v703 = vadd.f32 %v702, %v701
    %v704 = vmin.f32 %v677, %v703
    %v705 = vmin.f32 %v704, %v673
    %v706 = vld [vmem:[#allocation2 + $0x1e] sm:$0x1]
    %v707 = vadd.f32 %v706, %v705
    %v708 = vmin.f32 %v681, %v707
    %v709 = vmin.f32 %v708, %v677
    %v710 = vld [vmem:[#allocation2 + $0x1f] sm:$0x1]
    %v711 = vadd.f32 %v710, %v709
    %v712 = vld [vmem:[#allocation2 + $0x20] sm:$0x1]
    %v713 = vadd.f32 %v683, %v712
    %v714 = vmin.f32 %v687, %v713
    %v715 = vmin.f32 %v714, %v683
    %v716 = vld [vmem:[#allocation2 + $0x21] sm:$0x1]
    %v717 = vadd.f32 %v716, %v715
    %v718 = vmin.f32 %v691, %v717
    %v719 = vmin.f32 %v718, %v687
    %v720 = vld [vmem:[#allocation2 + $0x22] sm:$0x1]
    %v721 = vadd.f32 %v720, %v719
    %v722 = vmin.f32 %v695, %v721
    %v723 = vmin.f32 %v722, %v691
    %v724 = vld [vmem:[#allocation2 + $0x23] sm:$0x1]
    %v725 = vadd.f32 %v724, %v723
    %v726 = vmin.f32 %v699, %v725
    %v727 = vmin.f32 %v726, %v695
    %v728 = vld [vmem:[#allocation2 + $0x24] sm:$0x1]
    %v729 = vadd.f32 %v728, %v727
    %v730 = vmin.f32 %v703, %v729
    %v731 = vmin.f32 %v730, %v699
    %v732 = vld [vmem:[#allocation2 + $0x25] sm:$0x1]
    %v733 = vadd.f32 %v732, %v731
    %v734 = vmin.f32 %v707, %v733
    %v735 = vmin.f32 %v734, %v703
    %v736 = vld [vmem:[#allocation2 + $0x26] sm:$0x1]
    %v737 = vadd.f32 %v736, %v735
    %v738 = vmin.f32 %v711, %v737
    %v739 = vmin.f32 %v738, %v707
    %v740 = vld [vmem:[#allocation2 + $0x27] sm:$0x1]
    %v741 = vadd.f32 %v740, %v739
    %v742 = vld [vmem:[#allocation2 + $0x28] sm:$0x1]
    %v743 = vadd.f32 %v713, %v742
    %v744 = vmin.f32 %v717, %v743
    %v745 = vmin.f32 %v744, %v713
    %v746 = vld [vmem:[#allocation2 + $0x29] sm:$0x1]
    %v747 = vadd.f32 %v746, %v745
    %v748 = vmin.f32 %v721, %v747
    %v749 = vmin.f32 %v748, %v717
    %v750 = vld [vmem:[#allocation2 + $0x2a] sm:$0x1]
    %v751 = vadd.f32 %v750, %v749
    %v752 = vmin.f32 %v725, %v751
    %v753 = vmin.f32 %v752, %v721
    %v754 = vld [vmem:[#allocation2 + $0x2b] sm:$0x1]
    %v755 = vadd.f32 %v754, %v753
    %v756 = vmin.f32 %v729, %v755
    %v757 = vmin.f32 %v756, %v725
    %v758 = vld [vmem:[#allocation2 + $0x2c] sm:$0x1]
    %v759 = vadd.f32 %v758, %v757
    %v760 = vmin.f32 %v733, %v759
    %v761 = vmin.f32 %v760, %v729
    %v762 = vld [vmem:[#allocation2 + $0x2d] sm:$0x1]
    %v763 = vadd.f32 %v762, %v761
    %v764 = vmin.f32 %v737, %v763
    %v765 = vmin.f32 %v764, %v733
    %v766 = vld [vmem:[#allocation2 + $0x2e] sm:$0x1]
    %v767 = vadd.f32 %v766, %v765
    %v768 = vmin.f32 %v741, %v767
    %v769 = vmin.f32 %v768, %v737
    %v770 = vld [vmem:[#allocation2 + $0x2f] sm:$0x1]
    %v771 = vadd.f32 %v770, %v769
    %v772 = vld [vmem:[#allocation2 + $0x30] sm:$0x1]
    %v773 = vadd.f32 %v743, %v772
    %v774 = vmin.f32 %v747, %v773
    %v775 = vmin.f32 %v774, %v743
    %v776 = vld [vmem:[#allocation2 + $0x31] sm:$0x1]
    %v777 = vadd.f32 %v776, %v775
    %v778 = vmin.f32 %v751, %v777
    %v779 = vmin.f32 %v778, %v747
    %v780 = vld [vmem:[#allocation2 + $0x32] sm:$0x1]
    %v781 = vadd.f32 %v780, %v779
    %v782 = vmin.f32 %v755, %v781
    %v783 = vmin.f32 %v782, %v751
    %v784 = vld [vmem:[#allocation2 + $0x33] sm:$0x1]
    %v785 = vadd.f32 %v784, %v783
    %v786 = vmin.f32 %v759, %v785
    %v787 = vmin.f32 %v786, %v755
    %v788 = vld [vmem:[#allocation2 + $0x34] sm:$0x1]
    %v789 = vadd.f32 %v788, %v787
    %v790 = vmin.f32 %v763, %v789
    %v791 = vmin.f32 %v790, %v759
    %v792 = vld [vmem:[#allocation2 + $0x35] sm:$0x1]
    %v793 = vadd.f32 %v792, %v791
    %v794 = vmin.f32 %v767, %v793
    %v795 = vmin.f32 %v794, %v763
    %v796 = vld [vmem:[#allocation2 + $0x36] sm:$0x1]
    %v797 = vadd.f32 %v796, %v795
    %v798 = vmin.f32 %v771, %v797
    %v799 = vmin.f32 %v798, %v767
    %v800 = vld [vmem:[#allocation2 + $0x37] sm:$0x1]
    %v801 = vadd.f32 %v800, %v799
    %v802 = vld [vmem:[#allocation2 + $0x38] sm:$0x1]
    %v803 = vadd.f32 %v773, %v802
    %v804 = vmin.f32 %v777, %v803
    %v805 = vmin.f32 %v804, %v773
    %v806 = vld [vmem:[#allocation2 + $0x39] sm:$0x1]
    %v807 = vadd.f32 %v806, %v805
    %v808 = vmin.f32 %v781, %v807
    %v809 = vmin.f32 %v808, %v777
    %v810 = vld [vmem:[#allocation2 + $0x3a] sm:$0x1]
    %v811 = vadd.f32 %v810, %v809
    %v812 = vmin.f32 %v785, %v811
    %v813 = vmin.f32 %v812, %v781
    %v814 = vld [vmem:[#allocation2 + $0x3b] sm:$0x1]
    %v815 = vadd.f32 %v814, %v813
    %v816 = vmin.f32 %v789, %v815
    %v817 = vmin.f32 %v816, %v785
    %v818 = vld [vmem:[#allocation2 + $0x3c] sm:$0x1]
    %v819 = vadd.f32 %v818, %v817
    %v820 = vmin.f32 %v793, %v819
    %v821 = vmin.f32 %v820, %v789
    %v822 = vld [vmem:[#allocation2 + $0x3d] sm:$0x1]
    %v823 = vadd.f32 %v822, %v821
    %v824 = vmin.f32 %v797, %v823
    %v825 = vmin.f32 %v824, %v793
    %v826 = vld [vmem:[#allocation2 + $0x3e] sm:$0x1]
    %v827 = vadd.f32 %v826, %v825
    %v828 = vmin.f32 %v801, %v827
    %v829 = vmin.f32 %v828, %v797
    %v830 = vld [vmem:[#allocation2 + $0x3f] sm:$0x1]
    %v831 = vadd.f32 %v830, %v829
    %v832 = vand.u32 2147483647, %v831
    %v833 = vsub.f32 %v81, %v113
    %v834 = vsub.f32 %v82, %v114
    %v835 = vsub.f32 %v83, %v115
    %v836 = vsub.f32 %v84, %v116
    %v837 = vsub.f32 %v85, %v117
    %v838 = vsub.f32 %v86, %v118
    %v839 = vsub.f32 %v87, %v119
    %v840 = vsub.f32 %v88, %v120
    %v841 = vsub.f32 %v89, %v121
    %v842 = vsub.f32 %v90, %v122
    %v843 = vsub.f32 %v91, %v123
    %v844 = vsub.f32 %v92, %v124
    %v845 = vsub.f32 %v93, %v125
    %v846 = vsub.f32 %v94, %v126
    %v847 = vsub.f32 %v95, %v127
    %v848 = vsub.f32 %v96, %v128
    %v849 = vsub.f32 %v97, %v129
    %v850 = vsub.f32 %v98, %v130
    %v851 = vsub.f32 %v99, %v131
    %v852 = vsub.f32 %v100, %v132
    %v853 = vsub.f32 %v101, %v133
    %v854 = vsub.f32 %v102, %v134
    %v855 = vsub.f32 %v103, %v135
    %v856 = vsub.f32 %v104, %v136
    %v857 = vsub.f32 %v105, %v137
    %v858 = vsub.f32 %v106, %v138
    %v859 = vsub.f32 %v107, %v139
    %v860 = vsub.f32 %v108, %v140
    %v861 = vsub.f32 %v109, %v141
    %v862 = vsub.f32 %v110, %v142
    %v863 = vsub.f32 %v111, %v143
    %v864 = vsub.f32 %v112, %v144
    %v865 = vmul.f32 %v833, %v833
    %v866 = vmul.f32 %v834, %v834
    %v867 = vmul.f32 %v835, %v835
    %v868 = vmul.f32 %v836, %v836
    %v869 = vmul.f32 %v837, %v837
    %v870 = vmul.f32 %v838, %v838
    %v871 = vmul.f32 %v839, %v839
    %v872 = vmul.f32 %v840, %v840
    %v873 = vmul.f32 %v841, %v841
    %v874 = vmul.f32 %v842, %v842
    %v875 = vmul.f32 %v843, %v843
    %v876 = vmul.f32 %v844, %v844
    %v877 = vmul.f32 %v845, %v845
    %v878 = vmul.f32 %v846, %v846
    %v879 = vmul.f32 %v847, %v847
    %v880 = vmul.f32 %v848, %v848
    %v881 = vmul.f32 %v849, %v849
    %v882 = vmul.f32 %v850, %v850
    %v883 = vmul.f32 %v851, %v851
    %v884 = vmul.f32 %v852, %v852
    %v885 = vmul.f32 %v853, %v853
    %v886 = vmul.f32 %v854, %v854
    %v887 = vmul.f32 %v855, %v855
    %v888 = vmul.f32 %v856, %v856
    %v889 = vmul.f32 %v857, %v857
    %v890 = vmul.f32 %v858, %v858
    %v891 = vmul.f32 %v859, %v859
    %v892 = vmul.f32 %v860, %v860
    %v893 = vmul.f32 %v861, %v861
    %v894 = vmul.f32 %v862, %v862
    %v895 = vmul.f32 %v863, %v863
    %v896 = vmul.f32 %v864, %v864
    %v897 = vadd.f32 %v865, %v869
    %v898 = vadd.f32 %v897, %v873
    %v899 = vadd.f32 %v898, %v877
    %v900 = vadd.f32 %v899, %v881
    %v901 = vadd.f32 %v900, %v885
    %v902 = vadd.f32 %v901, %v889
    %v903 = vadd.f32 %v902, %v893
    %v904 = vadd.f32 %v866, %v870
    %v905 = vadd.f32 %v904, %v874
    %v906 = vadd.f32 %v905, %v878
    %v907 = vadd.f32 %v906, %v882
    %v908 = vadd.f32 %v907, %v886
    %v909 = vadd.f32 %v908, %v890
    %v910 = vadd.f32 %v909, %v894
    %v911 = vadd.f32 %v867, %v871
    %v912 = vadd.f32 %v911, %v875
    %v913 = vadd.f32 %v912, %v879
    %v914 = vadd.f32 %v913, %v883
    %v915 = vadd.f32 %v914, %v887
    %v916 = vadd.f32 %v915, %v891
    %v917 = vadd.f32 %v916, %v895
    %v918 = vadd.f32 %v868, %v872
    %v919 = vadd.f32 %v918, %v876
    %v920 = vadd.f32 %v919, %v880
    %v921 = vadd.f32 %v920, %v884
    %v922 = vadd.f32 %v921, %v888
    %v923 = vadd.f32 %v922, %v892
    %v924 = vadd.f32 %v923, %v896
    %v925 = vadd.f32 %v903, %v910
    %v926 = vadd.f32 %v925, %v917
    %v927 = vadd.f32 %v926, %v924
    %v928 = vrot.slane %v927, 4
    %v929 = vadd.f32 %v927, %v928
    %v930 = vrot.slane %v929, 2
    %v931 = vadd.f32 %v929, %v930
    %v932 = vrot.slane %v931, 1
    %v933 = vadd.f32 %v931, %v932
    %v934 = vrsqrt.pop %v933
    %v935 = vmul.f32 %v933, %v934
    %vm936 = vcmp.eq.f32.partialorder %v933, inf
    %v937 = vsel %vm936, %v933, %v935
    %vm938 = vcmp.eq.f32.partialorder %v933, 0.0
    %v939 = vand.u32 %v933, 2147483648
    %v940 = vsel %vm938, %v939, %v937
    %v941 = vmul.f32 %v940, 0.125
    %v942 = vadd.f32 %v81, %v85
    %v943 = vadd.f32 %v942, %v89
    %v944 = vadd.f32 %v943, %v93
    %v945 = vadd.f32 %v944, %v97
    %v946 = vadd.f32 %v945, %v101
    %v947 = vadd.f32 %v946, %v105
    %v948 = vadd.f32 %v947, %v109
    %v949 = vadd.f32 %v82, %v86
    %v950 = vadd.f32 %v949, %v90
    %v951 = vadd.f32 %v950, %v94
    %v952 = vadd.f32 %v951, %v98
    %v953 = vadd.f32 %v952, %v102
    %v954 = vadd.f32 %v953, %v106
    %v955 = vadd.f32 %v954, %v110
    %v956 = vadd.f32 %v83, %v87
    %v957 = vadd.f32 %v956, %v91
    %v958 = vadd.f32 %v957, %v95
    %v959 = vadd.f32 %v958, %v99
    %v960 = vadd.f32 %v959, %v103
    %v961 = vadd.f32 %v960, %v107
    %v962 = vadd.f32 %v961, %v111
    %v963 = vadd.f32 %v84, %v88
    %v964 = vadd.f32 %v963, %v92
    %v965 = vadd.f32 %v964, %v96
    %v966 = vadd.f32 %v965, %v100
    %v967 = vadd.f32 %v966, %v104
    %v968 = vadd.f32 %v967, %v108
    %v969 = vadd.f32 %v968, %v112
    %v970 = vrcp.pop 8.0
    %v971 = vmul.f32 %v948, %v970
    %v972 = vmul.f32 %v955, %v970
    %v973 = vmul.f32 %v962, %v970
    %v974 = vmul.f32 %v969, %v970
    %v975 = vsub.f32 %v81, %v971
    %v976 = vsub.f32 %v82, %v972
    %v977 = vsub.f32 %v83, %v973
    %v978 = vsub.f32 %v84, %v974
    %v979 = vsub.f32 %v85, %v971
    %v980 = vsub.f32 %v86, %v972
    %v981 = vsub.f32 %v87, %v973
    %v982 = vsub.f32 %v88, %v974
    %v983 = vsub.f32 %v89, %v971
    %v984 = vsub.f32 %v90, %v972
    %v985 = vsub.f32 %v91, %v973
    %v986 = vsub.f32 %v92, %v974
    %v987 = vsub.f32 %v93, %v971
    %v988 = vsub.f32 %v94, %v972
    %v989 = vsub.f32 %v95, %v973
    %v990 = vsub.f32 %v96, %v974
    %v991 = vsub.f32 %v97, %v971
    %v992 = vsub.f32 %v98, %v972
    %v993 = vsub.f32 %v99, %v973
    %v994 = vsub.f32 %v100, %v974
    %v995 = vsub.f32 %v101, %v971
    %v996 = vsub.f32 %v102, %v972
    %v997 = vsub.f32 %v103, %v973
    %v998 = vsub.f32 %v104, %v974
    %v999 = vsub.f32 %v105, %v971
    %v1000 = vsub.f32 %v106, %v972
    %v1001 = vsub.f32 %v107, %v973
    %v1002 = vsub.f32 %v108, %v974
    %v1003 = vsub.f32 %v109, %v971
    %v1004 = vsub.f32 %v110, %v972
    %v1005 = vsub.f32 %v111, %v973
    %v1006 = vsub.f32 %v112, %v974
    %v1007 = vmul.f32 %v975, %v979
    %v1008 = vmul.f32 %v976, %v980
    %v1009 = vmul.f32 %v977, %v981
    %v1010 = vmul.f32 %v978, %v982
    %v1011 = vmul.f32 %v979, %v983
    %v1012 = vmul.f32 %v980, %v984
    %v1013 = vmul.f32 %v981, %v985
    %v1014 = vmul.f32 %v982, %v986
    %v1015 = vmul.f32 %v983, %v987
    %v1016 = vmul.f32 %v984, %v988
    %v1017 = vmul.f32 %v985, %v989
    %v1018 = vmul.f32 %v986, %v990
    %v1019 = vmul.f32 %v987, %v991
    %v1020 = vmul.f32 %v988, %v992
    %v1021 = vmul.f32 %v989, %v993
    %v1022 = vmul.f32 %v990, %v994
    %v1023 = vmul.f32 %v991, %v995
    %v1024 = vmul.f32 %v992, %v996
    %v1025 = vmul.f32 %v993, %v997
    %v1026 = vmul.f32 %v994, %v998
    %v1027 = vmul.f32 %v995, %v999
    %v1028 = vmul.f32 %v996, %v1000
    %v1029 = vmul.f32 %v997, %v1001
    %v1030 = vmul.f32 %v998, %v1002
    %v1031 = vmul.f32 %v999, %v1003
    %v1032 = vmul.f32 %v1000, %v1004
    %v1033 = vmul.f32 %v1001, %v1005
    %v1034 = vmul.f32 %v1002, %v1006
    %v1035 = vadd.f32 %v1007, %v1011
    %v1036 = vadd.f32 %v1035, %v1015
    %v1037 = vadd.f32 %v1036, %v1019
    %v1038 = vadd.f32 %v1037, %v1023
    %v1039 = vadd.f32 %v1038, %v1027
    %v1040 = vadd.f32 %v1039, %v1031
    %v1041 = vadd.f32 %v1008, %v1012
    %v1042 = vadd.f32 %v1041, %v1016
    %v1043 = vadd.f32 %v1042, %v1020
    %v1044 = vadd.f32 %v1043, %v1024
    %v1045 = vadd.f32 %v1044, %v1028
    %v1046 = vadd.f32 %v1045, %v1032
    %v1047 = vadd.f32 %v1009, %v1013
    %v1048 = vadd.f32 %v1047, %v1017
    %v1049 = vadd.f32 %v1048, %v1021
    %v1050 = vadd.f32 %v1049, %v1025
    %v1051 = vadd.f32 %v1050, %v1029
    %v1052 = vadd.f32 %v1051, %v1033
    %v1053 = vadd.f32 %v1010, %v1014
    %v1054 = vadd.f32 %v1053, %v1018
    %v1055 = vadd.f32 %v1054, %v1022
    %v1056 = vadd.f32 %v1055, %v1026
    %v1057 = vadd.f32 %v1056, %v1030
    %v1058 = vadd.f32 %v1057, %v1034
    %v1059 = vmul.f32 %v975, %v983
    %v1060 = vmul.f32 %v976, %v984
    %v1061 = vmul.f32 %v977, %v985
    %v1062 = vmul.f32 %v978, %v986
    %v1063 = vmul.f32 %v979, %v987
    %v1064 = vmul.f32 %v980, %v988
    %v1065 = vmul.f32 %v981, %v989
    %v1066 = vmul.f32 %v982, %v990
    %v1067 = vmul.f32 %v983, %v991
    %v1068 = vmul.f32 %v984, %v992
    %v1069 = vmul.f32 %v985, %v993
    %v1070 = vmul.f32 %v986, %v994
    %v1071 = vmul.f32 %v987, %v995
    %v1072 = vmul.f32 %v988, %v996
    %v1073 = vmul.f32 %v989, %v997
    %v1074 = vmul.f32 %v990, %v998
    %v1075 = vmul.f32 %v991, %v999
    %v1076 = vmul.f32 %v992, %v1000
    %v1077 = vmul.f32 %v993, %v1001
    %v1078 = vmul.f32 %v994, %v1002
    %v1079 = vmul.f32 %v995, %v1003
    %v1080 = vmul.f32 %v996, %v1004
    %v1081 = vmul.f32 %v997, %v1005
    %v1082 = vmul.f32 %v998, %v1006
    %v1083 = vadd.f32 %v1059, %v1063
    %v1084 = vadd.f32 %v1083, %v1067
    %v1085 = vadd.f32 %v1084, %v1071
    %v1086 = vadd.f32 %v1085, %v1075
    %v1087 = vadd.f32 %v1086, %v1079
    %v1088 = vadd.f32 %v1060, %v1064
    %v1089 = vadd.f32 %v1088, %v1068
    %v1090 = vadd.f32 %v1089, %v1072
    %v1091 = vadd.f32 %v1090, %v1076
    %v1092 = vadd.f32 %v1091, %v1080
    %v1093 = vadd.f32 %v1061, %v1065
    %v1094 = vadd.f32 %v1093, %v1069
    %v1095 = vadd.f32 %v1094, %v1073
    %v1096 = vadd.f32 %v1095, %v1077
    %v1097 = vadd.f32 %v1096, %v1081
    %v1098 = vadd.f32 %v1062, %v1066
    %v1099 = vadd.f32 %v1098, %v1070
    %v1100 = vadd.f32 %v1099, %v1074
    %v1101 = vadd.f32 %v1100, %v1078
    %v1102 = vadd.f32 %v1101, %v1082
    %v1103 = vmul.f32 %v975, %v987
    %v1104 = vmul.f32 %v976, %v988
    %v1105 = vmul.f32 %v977, %v989
    %v1106 = vmul.f32 %v978, %v990
    %v1107 = vmul.f32 %v979, %v991
    %v1108 = vmul.f32 %v980, %v992
    %v1109 = vmul.f32 %v981, %v993
    %v1110 = vmul.f32 %v982, %v994
    %v1111 = vmul.f32 %v983, %v995
    %v1112 = vmul.f32 %v984, %v996
    %v1113 = vmul.f32 %v985, %v997
    %v1114 = vmul.f32 %v986, %v998
    %v1115 = vmul.f32 %v987, %v999
    %v1116 = vmul.f32 %v988, %v1000
    %v1117 = vmul.f32 %v989, %v1001
    %v1118 = vmul.f32 %v990, %v1002
    %v1119 = vmul.f32 %v991, %v1003
    %v1120 = vmul.f32 %v992, %v1004
    %v1121 = vmul.f32 %v993, %v1005
    %v1122 = vmul.f32 %v994, %v1006
    %v1123 = vadd.f32 %v1103, %v1107
    %v1124 = vadd.f32 %v1123, %v1111
    %v1125 = vadd.f32 %v1124, %v1115
    %v1126 = vadd.f32 %v1125, %v1119
    %v1127 = vadd.f32 %v1104, %v1108
    %v1128 = vadd.f32 %v1127, %v1112
    %v1129 = vadd.f32 %v1128, %v1116
    %v1130 = vadd.f32 %v1129, %v1120
    %v1131 = vadd.f32 %v1105, %v1109
    %v1132 = vadd.f32 %v1131, %v1113
    %v1133 = vadd.f32 %v1132, %v1117
    %v1134 = vadd.f32 %v1133, %v1121
    %v1135 = vadd.f32 %v1106, %v1110
    %v1136 = vadd.f32 %v1135, %v1114
    %v1137 = vadd.f32 %v1136, %v1118
    %v1138 = vadd.f32 %v1137, %v1122
    %v1139 = vmul.f32 %v975, %v991
    %v1140 = vmul.f32 %v976, %v992
    %v1141 = vmul.f32 %v977, %v993
    %v1142 = vmul.f32 %v978, %v994
    %v1143 = vmul.f32 %v979, %v995
    %v1144 = vmul.f32 %v980, %v996
    %v1145 = vmul.f32 %v981, %v997
    %v1146 = vmul.f32 %v982, %v998
    %v1147 = vmul.f32 %v983, %v999
    %v1148 = vmul.f32 %v984, %v1000
    %v1149 = vmul.f32 %v985, %v1001
    %v1150 = vmul.f32 %v986, %v1002
    %v1151 = vmul.f32 %v987, %v1003
    %v1152 = vmul.f32 %v988, %v1004
    %v1153 = vmul.f32 %v989, %v1005
    %v1154 = vmul.f32 %v990, %v1006
    %v1155 = vadd.f32 %v1139, %v1143
    %v1156 = vadd.f32 %v1155, %v1147
    %v1157 = vadd.f32 %v1156, %v1151
    %v1158 = vadd.f32 %v1140, %v1144
    %v1159 = vadd.f32 %v1158, %v1148
    %v1160 = vadd.f32 %v1159, %v1152
    %v1161 = vadd.f32 %v1141, %v1145
    %v1162 = vadd.f32 %v1161, %v1149
    %v1163 = vadd.f32 %v1162, %v1153
    %v1164 = vadd.f32 %v1142, %v1146
    %v1165 = vadd.f32 %v1164, %v1150
    %v1166 = vadd.f32 %v1165, %v1154
    %v1167 = vmul.f32 %v975, %v995
    %v1168 = vmul.f32 %v976, %v996
    %v1169 = vmul.f32 %v977, %v997
    %v1170 = vmul.f32 %v978, %v998
    %v1171 = vmul.f32 %v979, %v999
    %v1172 = vmul.f32 %v980, %v1000
    %v1173 = vmul.f32 %v981, %v1001
    %v1174 = vmul.f32 %v982, %v1002
    %v1175 = vmul.f32 %v983, %v1003
    %v1176 = vmul.f32 %v984, %v1004
    %v1177 = vmul.f32 %v985, %v1005
    %v1178 = vmul.f32 %v986, %v1006
    %v1179 = vadd.f32 %v1167, %v1171
    %v1180 = vadd.f32 %v1179, %v1175
    %v1181 = vadd.f32 %v1168, %v1172
    %v1182 = vadd.f32 %v1181, %v1176
    %v1183 = vadd.f32 %v1169, %v1173
    %v1184 = vadd.f32 %v1183, %v1177
    %v1185 = vadd.f32 %v1170, %v1174
    %v1186 = vadd.f32 %v1185, %v1178
    %v1187 = vadd.f32 %v113, %v117
    %v1188 = vadd.f32 %v1187, %v121
    %v1189 = vadd.f32 %v1188, %v125
    %v1190 = vadd.f32 %v1189, %v129
    %v1191 = vadd.f32 %v1190, %v133
    %v1192 = vadd.f32 %v1191, %v137
    %v1193 = vadd.f32 %v1192, %v141
    %v1194 = vadd.f32 %v114, %v118
    %v1195 = vadd.f32 %v1194, %v122
    %v1196 = vadd.f32 %v1195, %v126
    %v1197 = vadd.f32 %v1196, %v130
    %v1198 = vadd.f32 %v1197, %v134
    %v1199 = vadd.f32 %v1198, %v138
    %v1200 = vadd.f32 %v1199, %v142
    %v1201 = vadd.f32 %v115, %v119
    %v1202 = vadd.f32 %v1201, %v123
    %v1203 = vadd.f32 %v1202, %v127
    %v1204 = vadd.f32 %v1203, %v131
    %v1205 = vadd.f32 %v1204, %v135
    %v1206 = vadd.f32 %v1205, %v139
    %v1207 = vadd.f32 %v1206, %v143
    %v1208 = vadd.f32 %v116, %v120
    %v1209 = vadd.f32 %v1208, %v124
    %v1210 = vadd.f32 %v1209, %v128
    %v1211 = vadd.f32 %v1210, %v132
    %v1212 = vadd.f32 %v1211, %v136
    %v1213 = vadd.f32 %v1212, %v140
    %v1214 = vadd.f32 %v1213, %v144
    %v1215 = vmul.f32 %v1193, %v970
    %v1216 = vmul.f32 %v1200, %v970
    %v1217 = vmul.f32 %v1207, %v970
    %v1218 = vmul.f32 %v1214, %v970
    %v1219 = vsub.f32 %v113, %v1215
    %v1220 = vsub.f32 %v114, %v1216
    %v1221 = vsub.f32 %v115, %v1217
    %v1222 = vsub.f32 %v116, %v1218
    %v1223 = vsub.f32 %v117, %v1215
    %v1224 = vsub.f32 %v118, %v1216
    %v1225 = vsub.f32 %v119, %v1217
    %v1226 = vsub.f32 %v120, %v1218
    %v1227 = vsub.f32 %v121, %v1215
    %v1228 = vsub.f32 %v122, %v1216
    %v1229 = vsub.f32 %v123, %v1217
    %v1230 = vsub.f32 %v124, %v1218
    %v1231 = vsub.f32 %v125, %v1215
    %v1232 = vsub.f32 %v126, %v1216
    %v1233 = vsub.f32 %v127, %v1217
    %v1234 = vsub.f32 %v128, %v1218
    %v1235 = vsub.f32 %v129, %v1215
    %v1236 = vsub.f32 %v130, %v1216
    %v1237 = vsub.f32 %v131, %v1217
    %v1238 = vsub.f32 %v132, %v1218
    %v1239 = vsub.f32 %v133, %v1215
    %v1240 = vsub.f32 %v134, %v1216
    %v1241 = vsub.f32 %v135, %v1217
    %v1242 = vsub.f32 %v136, %v1218
    %v1243 = vsub.f32 %v137, %v1215
    %v1244 = vsub.f32 %v138, %v1216
    %v1245 = vsub.f32 %v139, %v1217
    %v1246 = vsub.f32 %v140, %v1218
    %v1247 = vsub.f32 %v141, %v1215
    %v1248 = vsub.f32 %v142, %v1216
    %v1249 = vsub.f32 %v143, %v1217
    %v1250 = vsub.f32 %v144, %v1218
    %v1251 = vmul.f32 %v1219, %v1223
    %v1252 = vmul.f32 %v1220, %v1224
    %v1253 = vmul.f32 %v1221, %v1225
    %v1254 = vmul.f32 %v1222, %v1226
    %v1255 = vmul.f32 %v1223, %v1227
    %v1256 = vmul.f32 %v1224, %v1228
    %v1257 = vmul.f32 %v1225, %v1229
    %v1258 = vmul.f32 %v1226, %v1230
    %v1259 = vmul.f32 %v1227, %v1231
    %v1260 = vmul.f32 %v1228, %v1232
    %v1261 = vmul.f32 %v1229, %v1233
    %v1262 = vmul.f32 %v1230, %v1234
    %v1263 = vmul.f32 %v1231, %v1235
    %v1264 = vmul.f32 %v1232, %v1236
    %v1265 = vmul.f32 %v1233, %v1237
    %v1266 = vmul.f32 %v1234, %v1238
    %v1267 = vmul.f32 %v1235, %v1239
    %v1268 = vmul.f32 %v1236, %v1240
    %v1269 = vmul.f32 %v1237, %v1241
    %v1270 = vmul.f32 %v1238, %v1242
    %v1271 = vmul.f32 %v1239, %v1243
    %v1272 = vmul.f32 %v1240, %v1244
    %v1273 = vmul.f32 %v1241, %v1245
    %v1274 = vmul.f32 %v1242, %v1246
    %v1275 = vmul.f32 %v1243, %v1247
    %v1276 = vmul.f32 %v1244, %v1248
    %v1277 = vmul.f32 %v1245, %v1249
    %v1278 = vmul.f32 %v1246, %v1250
    %v1279 = vadd.f32 %v1251, %v1255
    %v1280 = vadd.f32 %v1279, %v1259
    %v1281 = vadd.f32 %v1280, %v1263
    %v1282 = vadd.f32 %v1281, %v1267
    %v1283 = vadd.f32 %v1282, %v1271
    %v1284 = vadd.f32 %v1283, %v1275
    %v1285 = vadd.f32 %v1252, %v1256
    %v1286 = vadd.f32 %v1285, %v1260
    %v1287 = vadd.f32 %v1286, %v1264
    %v1288 = vadd.f32 %v1287, %v1268
    %v1289 = vadd.f32 %v1288, %v1272
    %v1290 = vadd.f32 %v1289, %v1276
    %v1291 = vadd.f32 %v1253, %v1257
    %v1292 = vadd.f32 %v1291, %v1261
    %v1293 = vadd.f32 %v1292, %v1265
    %v1294 = vadd.f32 %v1293, %v1269
    %v1295 = vadd.f32 %v1294, %v1273
    %v1296 = vadd.f32 %v1295, %v1277
    %v1297 = vadd.f32 %v1254, %v1258
    %v1298 = vadd.f32 %v1297, %v1262
    %v1299 = vadd.f32 %v1298, %v1266
    %v1300 = vadd.f32 %v1299, %v1270
    %v1301 = vadd.f32 %v1300, %v1274
    %v1302 = vadd.f32 %v1301, %v1278
    %v1303 = vmul.f32 %v1219, %v1227
    %v1304 = vmul.f32 %v1220, %v1228
    %v1305 = vmul.f32 %v1221, %v1229
    %v1306 = vmul.f32 %v1222, %v1230
    %v1307 = vmul.f32 %v1223, %v1231
    %v1308 = vmul.f32 %v1224, %v1232
    %v1309 = vmul.f32 %v1225, %v1233
    %v1310 = vmul.f32 %v1226, %v1234
    %v1311 = vmul.f32 %v1227, %v1235
    %v1312 = vmul.f32 %v1228, %v1236
    %v1313 = vmul.f32 %v1229, %v1237
    %v1314 = vmul.f32 %v1230, %v1238
    %v1315 = vmul.f32 %v1231, %v1239
    %v1316 = vmul.f32 %v1232, %v1240
    %v1317 = vmul.f32 %v1233, %v1241
    %v1318 = vmul.f32 %v1234, %v1242
    %v1319 = vmul.f32 %v1235, %v1243
    %v1320 = vmul.f32 %v1236, %v1244
    %v1321 = vmul.f32 %v1237, %v1245
    %v1322 = vmul.f32 %v1238, %v1246
    %v1323 = vmul.f32 %v1239, %v1247
    %v1324 = vmul.f32 %v1240, %v1248
    %v1325 = vmul.f32 %v1241, %v1249
    %v1326 = vmul.f32 %v1242, %v1250
    %v1327 = vadd.f32 %v1303, %v1307
    %v1328 = vadd.f32 %v1327, %v1311
    %v1329 = vadd.f32 %v1328, %v1315
    %v1330 = vadd.f32 %v1329, %v1319
    %v1331 = vadd.f32 %v1330, %v1323
    %v1332 = vadd.f32 %v1304, %v1308
    %v1333 = vadd.f32 %v1332, %v1312
    %v1334 = vadd.f32 %v1333, %v1316
    %v1335 = vadd.f32 %v1334, %v1320
    %v1336 = vadd.f32 %v1335, %v1324
    %v1337 = vadd.f32 %v1305, %v1309
    %v1338 = vadd.f32 %v1337, %v1313
    %v1339 = vadd.f32 %v1338, %v1317
    %v1340 = vadd.f32 %v1339, %v1321
    %v1341 = vadd.f32 %v1340, %v1325
    %v1342 = vadd.f32 %v1306, %v1310
    %v1343 = vadd.f32 %v1342, %v1314
    %v1344 = vadd.f32 %v1343, %v1318
    %v1345 = vadd.f32 %v1344, %v1322
    %v1346 = vadd.f32 %v1345, %v1326
    %v1347 = vmul.f32 %v1219, %v1231
    %v1348 = vmul.f32 %v1220, %v1232
    %v1349 = vmul.f32 %v1221, %v1233
    %v1350 = vmul.f32 %v1222, %v1234
    %v1351 = vmul.f32 %v1223, %v1235
    %v1352 = vmul.f32 %v1224, %v1236
    %v1353 = vmul.f32 %v1225, %v1237
    %v1354 = vmul.f32 %v1226, %v1238
    %v1355 = vmul.f32 %v1227, %v1239
    %v1356 = vmul.f32 %v1228, %v1240
    %v1357 = vmul.f32 %v1229, %v1241
    %v1358 = vmul.f32 %v1230, %v1242
    %v1359 = vmul.f32 %v1231, %v1243
    %v1360 = vmul.f32 %v1232, %v1244
    %v1361 = vmul.f32 %v1233, %v1245
    %v1362 = vmul.f32 %v1234, %v1246
    %v1363 = vmul.f32 %v1235, %v1247
    %v1364 = vmul.f32 %v1236, %v1248
    %v1365 = vmul.f32 %v1237, %v1249
    %v1366 = vmul.f32 %v1238, %v1250
    %v1367 = vadd.f32 %v1347, %v1351
    %v1368 = vadd.f32 %v1367, %v1355
    %v1369 = vadd.f32 %v1368, %v1359
    %v1370 = vadd.f32 %v1369, %v1363
    %v1371 = vadd.f32 %v1348, %v1352
    %v1372 = vadd.f32 %v1371, %v1356
    %v1373 = vadd.f32 %v1372, %v1360
    %v1374 = vadd.f32 %v1373, %v1364
    %v1375 = vadd.f32 %v1349, %v1353
    %v1376 = vadd.f32 %v1375, %v1357
    %v1377 = vadd.f32 %v1376, %v1361
    %v1378 = vadd.f32 %v1377, %v1365
    %v1379 = vadd.f32 %v1350, %v1354
    %v1380 = vadd.f32 %v1379, %v1358
    %v1381 = vadd.f32 %v1380, %v1362
    %v1382 = vadd.f32 %v1381, %v1366
    %v1383 = vmul.f32 %v1219, %v1235
    %v1384 = vmul.f32 %v1220, %v1236
    %v1385 = vmul.f32 %v1221, %v1237
    %v1386 = vmul.f32 %v1222, %v1238
    %v1387 = vmul.f32 %v1223, %v1239
    %v1388 = vmul.f32 %v1224, %v1240
    %v1389 = vmul.f32 %v1225, %v1241
    %v1390 = vmul.f32 %v1226, %v1242
    %v1391 = vmul.f32 %v1227, %v1243
    %v1392 = vmul.f32 %v1228, %v1244
    %v1393 = vmul.f32 %v1229, %v1245
    %v1394 = vmul.f32 %v1230, %v1246
    %v1395 = vmul.f32 %v1231, %v1247
    %v1396 = vmul.f32 %v1232, %v1248
    %v1397 = vmul.f32 %v1233, %v1249
    %v1398 = vmul.f32 %v1234, %v1250
    %v1399 = vadd.f32 %v1383, %v1387
    %v1400 = vadd.f32 %v1399, %v1391
    %v1401 = vadd.f32 %v1400, %v1395
    %v1402 = vadd.f32 %v1384, %v1388
    %v1403 = vadd.f32 %v1402, %v1392
    %v1404 = vadd.f32 %v1403, %v1396
    %v1405 = vadd.f32 %v1385, %v1389
    %v1406 = vadd.f32 %v1405, %v1393
    %v1407 = vadd.f32 %v1406, %v1397
    %v1408 = vadd.f32 %v1386, %v1390
    %v1409 = vadd.f32 %v1408, %v1394
    %v1410 = vadd.f32 %v1409, %v1398
    %v1411 = vmul.f32 %v1219, %v1239
    %v1412 = vmul.f32 %v1220, %v1240
    %v1413 = vmul.f32 %v1221, %v1241
    %v1414 = vmul.f32 %v1222, %v1242
    %v1415 = vmul.f32 %v1223, %v1243
    %v1416 = vmul.f32 %v1224, %v1244
    %v1417 = vmul.f32 %v1225, %v1245
    %v1418 = vmul.f32 %v1226, %v1246
    %v1419 = vmul.f32 %v1227, %v1247
    %v1420 = vmul.f32 %v1228, %v1248
    %v1421 = vmul.f32 %v1229, %v1249
    %v1422 = vmul.f32 %v1230, %v1250
    %v1423 = vadd.f32 %v1411, %v1415
    %v1424 = vadd.f32 %v1423, %v1419
    %v1425 = vadd.f32 %v1412, %v1416
    %v1426 = vadd.f32 %v1425, %v1420
    %v1427 = vadd.f32 %v1413, %v1417
    %v1428 = vadd.f32 %v1427, %v1421
    %v1429 = vadd.f32 %v1414, %v1418
    %v1430 = vadd.f32 %v1429, %v1422
    %v1431 = vand.u32 2147483647, %v1040
    %v1432 = vand.u32 2147483647, %v1046
    %v1433 = vand.u32 2147483647, %v1052
    %v1434 = vand.u32 2147483647, %v1058
    %v1435 = vand.u32 2147483647, %v1284
    %v1436 = vand.u32 2147483647, %v1290
    %v1437 = vand.u32 2147483647, %v1296
    %v1438 = vand.u32 2147483647, %v1302
    %v1439 = vand.u32 2147483647, %v1087
    %v1440 = vand.u32 2147483647, %v1092
    %v1441 = vand.u32 2147483647, %v1097
    %v1442 = vand.u32 2147483647, %v1102
    %v1443 = vmax.f32 %v1431, %v1439
    %v1444 = vmax.f32 %v1432, %v1440
    %v1445 = vmax.f32 %v1433, %v1441
    %v1446 = vmax.f32 %v1434, %v1442
    %v1447 = vand.u32 2147483647, %v1331
    %v1448 = vand.u32 2147483647, %v1336
    %v1449 = vand.u32 2147483647, %v1341
    %v1450 = vand.u32 2147483647, %v1346
    %v1451 = vmax.f32 %v1435, %v1447
    %v1452 = vmax.f32 %v1436, %v1448
    %v1453 = vmax.f32 %v1437, %v1449
    %v1454 = vmax.f32 %v1438, %v1450
    %v1455 = vand.u32 2147483647, %v1126
    %v1456 = vand.u32 2147483647, %v1130
    %v1457 = vand.u32 2147483647, %v1134
    %v1458 = vand.u32 2147483647, %v1138
    %v1459 = vmax.f32 %v1443, %v1455
    %v1460 = vmax.f32 %v1444, %v1456
    %v1461 = vmax.f32 %v1445, %v1457
    %v1462 = vmax.f32 %v1446, %v1458
    %v1463 = vand.u32 2147483647, %v1370
    %v1464 = vand.u32 2147483647, %v1374
    %v1465 = vand.u32 2147483647, %v1378
    %v1466 = vand.u32 2147483647, %v1382
    %v1467 = vmax.f32 %v1451, %v1463
    %v1468 = vmax.f32 %v1452, %v1464
    %v1469 = vmax.f32 %v1453, %v1465
    %v1470 = vmax.f32 %v1454, %v1466
    %v1471 = vand.u32 2147483647, %v1157
    %v1472 = vand.u32 2147483647, %v1160
    %v1473 = vand.u32 2147483647, %v1163
    %v1474 = vand.u32 2147483647, %v1166
    %v1475 = vmax.f32 %v1459, %v1471
    %v1476 = vmax.f32 %v1460, %v1472
    %v1477 = vmax.f32 %v1461, %v1473
    %v1478 = vmax.f32 %v1462, %v1474
    %v1479 = vand.u32 2147483647, %v1401
    %v1480 = vand.u32 2147483647, %v1404
    %v1481 = vand.u32 2147483647, %v1407
    %v1482 = vand.u32 2147483647, %v1410
    %v1483 = vmax.f32 %v1467, %v1479
    %v1484 = vmax.f32 %v1468, %v1480
    %v1485 = vmax.f32 %v1469, %v1481
    %v1486 = vmax.f32 %v1470, %v1482
    %v1487 = vand.u32 2147483647, %v1180
    %v1488 = vand.u32 2147483647, %v1182
    %v1489 = vand.u32 2147483647, %v1184
    %v1490 = vand.u32 2147483647, %v1186
    %v1491 = vmax.f32 %v1475, %v1487
    %v1492 = vmax.f32 %v1476, %v1488
    %v1493 = vmax.f32 %v1477, %v1489
    %v1494 = vmax.f32 %v1478, %v1490
    %v1495 = vand.u32 2147483647, %v1424
    %v1496 = vand.u32 2147483647, %v1426
    %v1497 = vand.u32 2147483647, %v1428
    %v1498 = vand.u32 2147483647, %v1430
    %v1499 = vmax.f32 %v1483, %v1495
    %v1500 = vmax.f32 %v1484, %v1496
    %v1501 = vmax.f32 %v1485, %v1497
    %v1502 = vmax.f32 %v1486, %v1498
    %v1503 = vrcp.pop %v1491
    %v1504 = vrcp.pop %v1492
    %v1505 = vrcp.pop %v1493
    %v1506 = vrcp.pop %v1494
    %v1507 = vrcp.pop %v1499
    %v1508 = vrcp.pop %v1500
    %v1509 = vrcp.pop %v1501
    %v1510 = vrcp.pop %v1502
    %v1511 = vmul.f32 %v1040, %v1503
    %v1512 = vmul.f32 %v1046, %v1504
    %v1513 = vmul.f32 %v1052, %v1505
    %v1514 = vmul.f32 %v1058, %v1506
    %v1515 = vmul.f32 %v1284, %v1507
    %v1516 = vmul.f32 %v1290, %v1508
    %v1517 = vmul.f32 %v1296, %v1509
    %v1518 = vmul.f32 %v1302, %v1510
    %v1519 = vsub.f32 %v1511, %v1515
    %v1520 = vsub.f32 %v1512, %v1516
    %v1521 = vsub.f32 %v1513, %v1517
    %v1522 = vsub.f32 %v1514, %v1518
    %v1523 = vand.u32 2147483647, %v1519
    %v1524 = vand.u32 2147483647, %v1520
    %v1525 = vand.u32 2147483647, %v1521
    %v1526 = vand.u32 2147483647, %v1522
    %v1527 = vmul.f32 %v1087, %v1503
    %v1528 = vmul.f32 %v1092, %v1504
    %v1529 = vmul.f32 %v1097, %v1505
    %v1530 = vmul.f32 %v1102, %v1506
    %v1531 = vmul.f32 %v1331, %v1507
    %v1532 = vmul.f32 %v1336, %v1508
    %v1533 = vmul.f32 %v1341, %v1509
    %v1534 = vmul.f32 %v1346, %v1510
    %v1535 = vsub.f32 %v1527, %v1531
    %v1536 = vsub.f32 %v1528, %v1532
    %v1537 = vsub.f32 %v1529, %v1533
    %v1538 = vsub.f32 %v1530, %v1534
    %v1539 = vand.u32 2147483647, %v1535
    %v1540 = vand.u32 2147483647, %v1536
    %v1541 = vand.u32 2147483647, %v1537
    %v1542 = vand.u32 2147483647, %v1538
    %v1543 = vadd.f32 %v1523, %v1539
    %v1544 = vadd.f32 %v1524, %v1540
    %v1545 = vadd.f32 %v1525, %v1541
    %v1546 = vadd.f32 %v1526, %v1542
    %v1547 = vmul.f32 %v1126, %v1503
    %v1548 = vmul.f32 %v1130, %v1504
    %v1549 = vmul.f32 %v1134, %v1505
    %v1550 = vmul.f32 %v1138, %v1506
    %v1551 = vmul.f32 %v1370, %v1507
    %v1552 = vmul.f32 %v1374, %v1508
    %v1553 = vmul.f32 %v1378, %v1509
    %v1554 = vmul.f32 %v1382, %v1510
    %v1555 = vsub.f32 %v1547, %v1551
    %v1556 = vsub.f32 %v1548, %v1552
    %v1557 = vsub.f32 %v1549, %v1553
    %v1558 = vsub.f32 %v1550, %v1554
    %v1559 = vand.u32 2147483647, %v1555
    %v1560 = vand.u32 2147483647, %v1556
    %v1561 = vand.u32 2147483647, %v1557
    %v1562 = vand.u32 2147483647, %v1558
    %v1563 = vadd.f32 %v1543, %v1559
    %v1564 = vadd.f32 %v1544, %v1560
    %v1565 = vadd.f32 %v1545, %v1561
    %v1566 = vadd.f32 %v1546, %v1562
    %v1567 = vmul.f32 %v1157, %v1503
    %v1568 = vmul.f32 %v1160, %v1504
    %v1569 = vmul.f32 %v1163, %v1505
    %v1570 = vmul.f32 %v1166, %v1506
    %v1571 = vmul.f32 %v1401, %v1507
    %v1572 = vmul.f32 %v1404, %v1508
    %v1573 = vmul.f32 %v1407, %v1509
    %v1574 = vmul.f32 %v1410, %v1510
    %v1575 = vsub.f32 %v1567, %v1571
    %v1576 = vsub.f32 %v1568, %v1572
    %v1577 = vsub.f32 %v1569, %v1573
    %v1578 = vsub.f32 %v1570, %v1574
    %v1579 = vand.u32 2147483647, %v1575
    %v1580 = vand.u32 2147483647, %v1576
    %v1581 = vand.u32 2147483647, %v1577
    %v1582 = vand.u32 2147483647, %v1578
    %v1583 = vadd.f32 %v1563, %v1579
    %v1584 = vadd.f32 %v1564, %v1580
    %v1585 = vadd.f32 %v1565, %v1581
    %v1586 = vadd.f32 %v1566, %v1582
    %v1587 = vmul.f32 %v1180, %v1503
    %v1588 = vmul.f32 %v1182, %v1504
    %v1589 = vmul.f32 %v1184, %v1505
    %v1590 = vmul.f32 %v1186, %v1506
    %v1591 = vmul.f32 %v1424, %v1507
    %v1592 = vmul.f32 %v1426, %v1508
    %v1593 = vmul.f32 %v1428, %v1509
    %v1594 = vmul.f32 %v1430, %v1510
    %v1595 = vsub.f32 %v1587, %v1591
    %v1596 = vsub.f32 %v1588, %v1592
    %v1597 = vsub.f32 %v1589, %v1593
    %v1598 = vsub.f32 %v1590, %v1594
    %v1599 = vand.u32 2147483647, %v1595
    %v1600 = vand.u32 2147483647, %v1596
    %v1601 = vand.u32 2147483647, %v1597
    %v1602 = vand.u32 2147483647, %v1598
    %v1603 = vadd.f32 %v1583, %v1599
    %v1604 = vadd.f32 %v1584, %v1600
    %v1605 = vadd.f32 %v1585, %v1601
    %v1606 = vadd.f32 %v1586, %v1602
    %v1607 = vadd.f32 %v1603, %v1604
    %v1608 = vadd.f32 %v1607, %v1605
    %v1609 = vadd.f32 %v1608, %v1606
    %v1610 = vrot.slane %v1609, 4
    %v1611 = vadd.f32 %v1609, %v1610
    %v1612 = vrot.slane %v1611, 2
    %v1613 = vadd.f32 %v1611, %v1612
    %v1614 = vrot.slane %v1613, 1
    %v1615 = vadd.f32 %v1613, %v1614
    %v1616 = vmul.f32 %v832, 0.4
    %v1617 = vmul.f32 %v941, 0.4
    %v1618 = vadd.f32 %v1616, %v1617
    %v1619 = vmul.f32 %v1615, 0.2
    %v1620 = vadd.f32 %v1618, %v1619
    %vm1621 = vcmp.gt.f32.partialorder %v263, 0.0
    %v1622 = vsel %vm1621, %v1620, 0.0
    %1623 = vst [vmem:[#allocation11] sm:$0x1] %v1622
    // Predicated region
    $region34: #{tpu_custom_call.1} parent=1 // pred_check
      _
    $region35: #{tpu_custom_call.1} parent=1 // pred_check_branch
      %1625 = sbr.rel (0) target = $region37
    $region36: #{tpu_custom_call.1} parent=1 // pred_region
      %s1627 = ssub.s32 16, 16
      %1628 = vsyncadd [#allocation5], %s1627
      %s1630 = sshll.u32 [#allocation11], 4
      %s1631 = int_to_ptr.vmem [resolvable:$true] %s1630
      %1633 = dma.vmem_to_hbm [thread:$0]  %s1631, 16, %s4, [#allocation5]
    $region37: #{tpu_custom_call.1} parent=1 // pred_fallthru
      _
    // Predicated region
    $region38: #{tpu_custom_call.1} parent=1 // pred_check
      _
    $region39: #{tpu_custom_call.1} parent=1 // pred_check_branch
      %1635 = sbr.rel (0) target = $region41
    $region40: #{tpu_custom_call.1} parent=1 // pred_region
      %1636 = dma.done [#allocation5], 16
    $region41: #{tpu_custom_call.1} parent=1 // pred_fallthru
      _
    %1637 = vsyncpa [#allocation4], 1
    %1638 = vsyncpa [#allocation7], 1
    %1639 = vsyncpa [#allocation10], 1
    %1640 = vsyncpa [#allocation5], 1

</llo_original>
